<compile_context>
chip_gen: v5e
topology: v5e:2x2
jax: 0.10.0
libtpu: 0.0.40
codegen_flags: <defaults>
</compile_context>

<pallas_src>
import functools

import jax
import jax.numpy as jnp
from jax.experimental import pallas as pl
from jax.experimental.pallas import tpu as pltpu


def _round_up(n, m):
    return ((n + m - 1) // m) * m


# ---------------------------------------------------------------------------
# One-time parameter packing: 9 tensors -> one bf16 weight slab (5 segments,
# each a full (P, P) tile, P a multiple of 128) + one f32 bias slab (8, P).
# Padding is numerically inert: padded weight rows/cols and padded bias lanes
# contribute exactly 0 and relu(0) = 0, so every intermediate activation is a
# clean lane-dense (tb, P) array whose extra lanes are zero.
# ---------------------------------------------------------------------------
def pack_params(params):
    we1, be1 = params["we1"], params["be1"]
    we2, be2 = params["we2"], params["be2"]
    wm1r, wm1s, bm1 = params["wm1r"], params["wm1s"], params["bm1"]
    wm2, bm2 = params["wm2"], params["bm2"]

    obs, hid = we1.shape
    rep = we2.shape[1]
    skill_dim = wm1s.shape[0]
    out_dim = wm2.shape[1]

    # Common pad width for rows/cols of every segment, activations and output.
    P = _round_up(max(obs, hid, rep, skill_dim, out_dim, 128), 128)

    def seg(w):
        r, c = w.shape
        return jnp.zeros((P, P), jnp.bfloat16).at[:r, :c].set(w.astype(jnp.bfloat16))

    # Segment order: we1, we2, wm1r, wm1s, wm2.  Row offset of segment i is
    # i*P, so every static slice inside the kernel is tile aligned.
    w_pack = jnp.concatenate(
        [seg(we1), seg(we2), seg(wm1r), seg(wm1s), seg(wm2)], axis=0)

    b_pack = jnp.zeros((8, P), jnp.float32)
    b_pack = b_pack.at[0, :hid].set(be1.reshape(-1))
    b_pack = b_pack.at[1, :rep].set(be2.reshape(-1))
    b_pack = b_pack.at[2, :hid].set(bm1.reshape(-1))
    b_pack = b_pack.at[3, :out_dim].set(bm2.reshape(-1))

    dims = dict(obs=obs, hid=hid, rep=rep, skill=skill_dim, out=out_dim, P=P)
    return w_pack, b_pack, dims


# ---------------------------------------------------------------------------
# Fused kernel: 5 MXU dots, all activations lane-dense (tb, P).
# ---------------------------------------------------------------------------
def _fused_kernel(x_ref, s_ref, w_ref, b_ref, o_ref, *, obs, skill, P):
    # Activations load f32; cast to bf16 only at the MXU boundary.
    xb = x_ref[...].astype(jnp.bfloat16)          # (tb, obs)
    sb = s_ref[...].astype(jnp.bfloat16)          # (tb, skill)

    # Static, tile-aligned slices of the packed slabs.  we1 / wm1s only need
    # their live rows (the tiny MXU K dim is not the bottleneck); all other
    # weight operands are full (P, P) tiles and all biases are full P lanes.
    we1 = w_ref[0 * P:0 * P + obs, :]             # (obs, P)
    we2 = w_ref[1 * P:2 * P, :]                   # (P, P)
    wm1r = w_ref[2 * P:3 * P, :]                  # (P, P)
    wm1s = w_ref[3 * P:3 * P + skill, :]          # (skill, P)
    wm2 = w_ref[4 * P:5 * P, :]                   # (P, P)
    be1 = b_ref[0:1, :]
    be2 = b_ref[1:2, :]
    bm1 = b_ref[2:3, :]
    bm2 = b_ref[3:4, :]

    # ---- encoder: rep = relu(relu(x @ We1 + be1) @ We2 + be2) ----
    h1 = jnp.maximum(
        jnp.dot(xb, we1, preferred_element_type=jnp.float32) + be1, 0.0)
    r = jnp.maximum(
        jnp.dot(h1.astype(jnp.bfloat16), we2,
                preferred_element_type=jnp.float32) + be2, 0.0)

    # ---- module head on (rep, skill) ----
    # concat([rep, skill]) @ Wm1  ==  rep @ Wm1_rep + skill @ Wm1_skill
    h2 = jnp.maximum(
        jnp.dot(r.astype(jnp.bfloat16), wm1r, preferred_element_type=jnp.float32)
        + jnp.dot(sb, wm1s, preferred_element_type=jnp.float32)
        + bm1, 0.0)

    out = jnp.dot(h2.astype(jnp.bfloat16), wm2,
                  preferred_element_type=jnp.float32) + bm2
    o_ref[...] = out.astype(o_ref.dtype)          # lane-dense bf16 (tb, P) store


def _forward_packed(x, skill, w_pack, b_pack, *, dims, tb_max):
    obs, skill_dim = dims["obs"], dims["skill"]
    out_dim, P = dims["out"], dims["P"]

    B = x.shape[0]
    b8 = _round_up(B, 8)
    tb = min(tb_max, b8)
    if b8 >= 16:
        # Keep >= 2 grid steps so v7x's two TensorCores both get work; on
        # v5e/v6e (single TC) a couple of big steps is equally good.
        tb = min(tb, _round_up(-(-b8 // 2), 8))
    b_pad = _round_up(B, tb)
    if b_pad != B:                     # ragged batch only: pad once, slice off
        x = jnp.pad(x, ((0, b_pad - B), (0, 0)))
        skill = jnp.pad(skill, ((0, b_pad - B), (0, 0)))

    kernel = functools.partial(_fused_kernel, obs=obs, skill=skill_dim, P=P)

    out_padded = pl.pallas_call(
        kernel,
        out_shape=jax.ShapeDtypeStruct((b_pad, P), jnp.bfloat16),
        grid_spec=pl.GridSpec(
            grid=(b_pad // tb,),
            in_specs=[
                pl.BlockSpec((tb, obs), lambda i: (i, 0)),
                pl.BlockSpec((tb, skill_dim), lambda i: (i, 0)),
                # Parameters: constant block index -> fetched once and kept
                # VMEM-resident across every grid step (~170 KiB total).
                pl.BlockSpec(w_pack.shape, lambda i: (0, 0)),
                pl.BlockSpec(b_pack.shape, lambda i: (0, 0)),
            ],
            out_specs=pl.BlockSpec((tb, P), lambda i: (i, 0)),
        ),
        compiler_params=pltpu.CompilerParams(
            dimension_semantics=("parallel",),   # batch axis over both v7x TCs
        ),
    )(x, skill, w_pack, b_pack)

    # Slice off lane/batch padding; return f32 like the PyTorch module.
    return out_padded[:B, :out_dim].astype(jnp.float32)


def build_with_encoder_forward(params, *, tb_max=1024):
    """Pack parameters ONCE; return a jitted fused forward(x, skill)."""
    w_pack, b_pack, dims = pack_params(params)

    @jax.jit
    def forward(x, skill):
        return _forward_packed(x, skill, w_pack, b_pack, dims=dims, tb_max=tb_max)

    return forward


# ---------------------------------------------------------------------------
# Synthetic parameters + pure-JAX reference.
# ---------------------------------------------------------------------------
def init_params(key, obs_dim, skill_dim, hidden, rep_dim, out_dim):
    keys = jax.random.split(key, 4)

    def lin(k, fan_in, fan_out):
        bound = 1.0 / jnp.sqrt(fan_in)
        kw, kb = jax.random.split(k)
        w = jax.random.uniform(kw, (fan_in, fan_out), jnp.float32, -bound, bound)
        b = jax.random.uniform(kb, (1, fan_out), jnp.float32, -bound, bound)
        return w, b

    we1, be1 = lin(keys[0], obs_dim, hidden)
    we2, be2 = lin(keys[1], hidden, rep_dim)
    wm1_full, bm1 = lin(keys[2], rep_dim + skill_dim, hidden)
    wm1r = wm1_full[:rep_dim]
    wm1s = wm1_full[rep_dim:]
    wm2, bm2 = lin(keys[3], hidden, out_dim)

    return dict(we1=we1, be1=be1, we2=we2, be2=be2,
                wm1r=wm1r, wm1s=wm1s, bm1=bm1, wm2=wm2, bm2=bm2)


def reference_forward(x, skill, p, *, use_bf16=True):
    """Pure-JAX reference mirroring WithEncoder.forward (optionally with the
    same bf16-at-the-MXU casts the kernel performs)."""
    def mm(a, w):
        if use_bf16:
            a = a.astype(jnp.bfloat16)
            w = w.astype(jnp.bfloat16)
        return jnp.dot(a, w, preferred_element_type=jnp.float32)

    h1 = jnp.maximum(mm(x, p["we1"]) + p["be1"], 0.0)
    r = jnp.maximum(mm(h1, p["we2"]) + p["be2"], 0.0)
    h2 = jnp.maximum(mm(r, p["wm1r"]) + mm(skill, p["wm1s"]) + p["bm1"], 0.0)
    return mm(h2, p["wm2"]) + p["bm2"]


if __name__ == "__main__":
    # TODO(synk): forward_mode / torch.distributions head construction is not
    # part of the fused kernel; only the deterministic forward pass is.
    B, OBS, SKILL, HID, REP, OUT = 1024, 16, 4, 32, 8, 6

    key = jax.random.PRNGKey(0)
    kx, ks, kp = jax.random.split(key, 3)
    x = jax.random.normal(kx, (B, OBS), jnp.float32)
    skill = jax.random.normal(ks, (B, SKILL), jnp.float32)
    params = init_params(kp, OBS, SKILL, HID, REP, OUT)

    forward = build_with_encoder_forward(params, tb_max=1024)   # pack once
    out = jax.block_until_ready(forward(x, skill))              # 2 grid steps of 512

    ref_bf16 = reference_forward(x, skill, params, use_bf16=True)
    ref_f32 = reference_forward(x, skill, params, use_bf16=False)

    assert out.shape == (B, OUT)
    # Kernel-equivalent (bf16 matmul) path: tight match (output is bf16-rounded).
    assert jnp.allclose(out, ref_bf16, atol=2e-2, rtol=2e-2)
    # Loose sanity check vs full-f32 math (bf16 weight/activation quantization).
    assert jnp.allclose(out, ref_f32, atol=8e-2, rtol=5e-2)

    print("KERNEL_OK")
</pallas_src>

<mosaic_0001>
module attributes {stable_mosaic.version = 11 : i64} {
  func.func @_fused_kernel(%arg0: i32, %arg1: memref<512x16xf32, #tpu.memory_space<vmem>>, %arg2: memref<512x4xf32, #tpu.memory_space<vmem>>, %arg3: memref<640x128xbf16, #tpu.memory_space<vmem>>, %arg4: memref<8x128xf32, #tpu.memory_space<vmem>>, %arg5: memref<512x128xbf16, #tpu.memory_space<vmem>>) attributes {dimension_semantics = [#tpu.dimension_semantics<parallel>], iteration_bounds = array<i64: 2>, scalar_prefetch = 0 : i64, scratch_operands = 0 : i64, tpu.core_type = #tpu.core_type<tc>, window_params = [{transform_indices = @transform_0, window_bounds = array<i64: 512, 16>}, {transform_indices = @transform_1, window_bounds = array<i64: 512, 4>}, {pipeline_mode = #tpu.pipeline_mode<synchronous>, transform_indices = @transform_2, window_bounds = array<i64: 640, 128>}, {pipeline_mode = #tpu.pipeline_mode<synchronous>, transform_indices = @transform_3, window_bounds = array<i64: 8, 128>}, {transform_indices = @transform_4, window_bounds = array<i64: 512, 128>}]} {
    %c0 = arith.constant 0 : index
    %c0_0 = arith.constant 0 : index
    %0 = vector.load %arg1[%c0, %c0_0] : memref<512x16xf32, #tpu.memory_space<vmem>>, vector<512x16xf32>
    %1 = arith.truncf %0 : vector<512x16xf32> to vector<512x16xbf16>
    %c0_1 = arith.constant 0 : index
    %c0_2 = arith.constant 0 : index
    %2 = vector.load %arg2[%c0_1, %c0_2] : memref<512x4xf32, #tpu.memory_space<vmem>>, vector<512x4xf32>
    %3 = arith.truncf %2 : vector<512x4xf32> to vector<512x4xbf16>
    %c0_3 = arith.constant 0 : index
    %c0_4 = arith.constant 0 : index
    %4 = vector.load %arg3[%c0_3, %c0_4] : memref<640x128xbf16, #tpu.memory_space<vmem>>, vector<16x128xbf16>
    %c128 = arith.constant 128 : index
    %c0_5 = arith.constant 0 : index
    %5 = vector.load %arg3[%c128, %c0_5] : memref<640x128xbf16, #tpu.memory_space<vmem>>, vector<128x128xbf16>
    %c256 = arith.constant 256 : index
    %c0_6 = arith.constant 0 : index
    %6 = vector.load %arg3[%c256, %c0_6] : memref<640x128xbf16, #tpu.memory_space<vmem>>, vector<128x128xbf16>
    %c384 = arith.constant 384 : index
    %c0_7 = arith.constant 0 : index
    %7 = vector.load %arg3[%c384, %c0_7] : memref<640x128xbf16, #tpu.memory_space<vmem>>, vector<4x128xbf16>
    %c512 = arith.constant 512 : index
    %c0_8 = arith.constant 0 : index
    %8 = vector.load %arg3[%c512, %c0_8] : memref<640x128xbf16, #tpu.memory_space<vmem>>, vector<128x128xbf16>
    %c0_9 = arith.constant 0 : index
    %c0_10 = arith.constant 0 : index
    %9 = vector.load %arg4[%c0_9, %c0_10] : memref<8x128xf32, #tpu.memory_space<vmem>>, vector<1x128xf32>
    %c1 = arith.constant 1 : index
    %c0_11 = arith.constant 0 : index
    %10 = vector.load %arg4[%c1, %c0_11] : memref<8x128xf32, #tpu.memory_space<vmem>>, vector<1x128xf32>
    %c2 = arith.constant 2 : index
    %c0_12 = arith.constant 0 : index
    %11 = vector.load %arg4[%c2, %c0_12] : memref<8x128xf32, #tpu.memory_space<vmem>>, vector<1x128xf32>
    %c3 = arith.constant 3 : index
    %c0_13 = arith.constant 0 : index
    %12 = vector.load %arg4[%c3, %c0_13] : memref<8x128xf32, #tpu.memory_space<vmem>>, vector<1x128xf32>
    %cst = arith.constant dense<0.000000e+00> : vector<512x128xf32>
    %13 = tpu.matmul %1, %4, %cst {dimension_numbers = #tpu.dot_dimension_numbers<[1], [0], [0], [1], [0, 0, 1, 1], [], []>} : vector<512x16xbf16>, vector<16x128xbf16>, vector<512x128xf32> -> vector<512x128xf32>
    %14 = vector.broadcast %9 : vector<1x128xf32> to vector<512x128xf32>
    %15 = arith.addf %13, %14 : vector<512x128xf32>
    %cst_14 = arith.constant 0.000000e+00 : f32
    %16 = vector.broadcast %cst_14 : f32 to vector<512x128xf32>
    %17 = arith.maximumf %15, %16 : vector<512x128xf32>
    %18 = arith.truncf %17 : vector<512x128xf32> to vector<512x128xbf16>
    %cst_15 = arith.constant dense<0.000000e+00> : vector<512x128xf32>
    %19 = tpu.matmul %18, %5, %cst_15 {dimension_numbers = #tpu.dot_dimension_numbers<[1], [0], [0], [1], [0, 0, 1, 1], [], []>} : vector<512x128xbf16>, vector<128x128xbf16>, vector<512x128xf32> -> vector<512x128xf32>
    %20 = vector.broadcast %10 : vector<1x128xf32> to vector<512x128xf32>
    %21 = arith.addf %19, %20 : vector<512x128xf32>
    %cst_16 = arith.constant 0.000000e+00 : f32
    %22 = vector.broadcast %cst_16 : f32 to vector<512x128xf32>
    %23 = arith.maximumf %21, %22 : vector<512x128xf32>
    %24 = arith.truncf %23 : vector<512x128xf32> to vector<512x128xbf16>
    %cst_17 = arith.constant dense<0.000000e+00> : vector<512x128xf32>
    %25 = tpu.matmul %24, %6, %cst_17 {dimension_numbers = #tpu.dot_dimension_numbers<[1], [0], [0], [1], [0, 0, 1, 1], [], []>} : vector<512x128xbf16>, vector<128x128xbf16>, vector<512x128xf32> -> vector<512x128xf32>
    %cst_18 = arith.constant dense<0.000000e+00> : vector<512x128xf32>
    %26 = tpu.matmul %3, %7, %cst_18 {dimension_numbers = #tpu.dot_dimension_numbers<[1], [0], [0], [1], [0, 0, 1, 1], [], []>} : vector<512x4xbf16>, vector<4x128xbf16>, vector<512x128xf32> -> vector<512x128xf32>
    %27 = arith.addf %25, %26 : vector<512x128xf32>
    %28 = vector.broadcast %11 : vector<1x128xf32> to vector<512x128xf32>
    %29 = arith.addf %27, %28 : vector<512x128xf32>
    %cst_19 = arith.constant 0.000000e+00 : f32
    %30 = vector.broadcast %cst_19 : f32 to vector<512x128xf32>
    %31 = arith.maximumf %29, %30 : vector<512x128xf32>
    %32 = arith.truncf %31 : vector<512x128xf32> to vector<512x128xbf16>
    %cst_20 = arith.constant dense<0.000000e+00> : vector<512x128xf32>
    %33 = tpu.matmul %32, %8, %cst_20 {dimension_numbers = #tpu.dot_dimension_numbers<[1], [0], [0], [1], [0, 0, 1, 1], [], []>} : vector<512x128xbf16>, vector<128x128xbf16>, vector<512x128xf32> -> vector<512x128xf32>
    %34 = vector.broadcast %12 : vector<1x128xf32> to vector<512x128xf32>
    %35 = arith.addf %33, %34 : vector<512x128xf32>
    %36 = arith.truncf %35 : vector<512x128xf32> to vector<512x128xbf16>
    %c0_21 = arith.constant 0 : index
    %c0_22 = arith.constant 0 : index
    %37 = vector.load %arg5[%c0_21, %c0_22] : memref<512x128xbf16, #tpu.memory_space<vmem>>, vector<512x128xbf16>
    tpu.vector_store %arg5[%c0_21, %c0_22], %36 {strides = array<i32>} : memref<512x128xbf16, #tpu.memory_space<vmem>>, vector<512x128xbf16>,
    return
  }
  func.func @transform_0(%arg0: i32) -> (i32, i32) {
    %c0_i32 = arith.constant 0 : i32
    %c0_i32_0 = arith.constant 0 : i32
    return %arg0, %c0_i32 : i32, i32
  }
  func.func @transform_1(%arg0: i32) -> (i32, i32) {
    %c0_i32 = arith.constant 0 : i32
    %c0_i32_0 = arith.constant 0 : i32
    return %arg0, %c0_i32 : i32, i32
  }
  func.func @transform_2(%arg0: i32) -> (i32, i32) {
    %c0_i32 = arith.constant 0 : i32
    %c0_i32_0 = arith.constant 0 : i32
    %c0_i32_1 = arith.constant 0 : i32
    return %c0_i32, %c0_i32_0 : i32, i32
  }
  func.func @transform_3(%arg0: i32) -> (i32, i32) {
    %c0_i32 = arith.constant 0 : i32
    %c0_i32_0 = arith.constant 0 : i32
    %c0_i32_1 = arith.constant 0 : i32
    return %c0_i32, %c0_i32_0 : i32, i32
  }
  func.func @transform_4(%arg0: i32) -> (i32, i32) {
    %c0_i32 = arith.constant 0 : i32
    %c0_i32_0 = arith.constant 0 : i32
    return %arg0, %c0_i32 : i32, i32
  }
}

</mosaic_0001>

<llo_original>
// kernel: forward.1
$region0: #{forward.1}
  #allocation0 [shape = 'u32[]', space=smem, size = 0x4, offset = 0x4, fixed_abs, tag = 'smem constant byte address 0x4 - core index']
  #allocation1 [shape = 'u32[72,128]{1,0:T(1,128)}', space=vmem, size = 0x9000, scoped, tag = 'internal scratch']
  %s0 = inlined_call_operand.vmem [shape: f32[1024,16], index: 0, kind: input, shape index: {}]
  %s1 = inlined_call_operand.vmem [shape: f32[1024,4], index: 1, kind: input, shape index: {}]
  %s2 = inlined_call_operand.vmem [shape: bf16[640,128], index: 2, kind: input, shape index: {}]
  %s3 = inlined_call_operand.vmem [shape: f32[8,128], index: 3, kind: input, shape index: {}]
  %s4 = inlined_call_operand.vmem [shape: bf16[1024,128], index: 4, kind: output, shape index: {}]
  %s5 = sld [smem:[#allocation0]]
  $region49: #{forward.1} parent=0
    _
  %s7 = ssub.s32 1, %s5
  %s8 = scalar_select 0, %s7, %s5
  loop: start=0, step=1, limit=4
  $region2: #{forward.1} parent=0 // loop_pre_header
    _
  $region3: #{forward.1} parent=0 // loop_header
    %s10 = sphi 0, %s14
    %p11 = scmp.ge.s32.totalorder %s10, 4
    %s20 = sphi 0, %s22
    %s23 = sphi 0, %s20
    %s24 = sphi 0, %s23
    %s40 = sphi 0, %s24
    %s46 = sphi 0, %s48
    %s49 = sphi 0, %s46
    %s50 = sphi 0, %s49
    %s66 = sphi 0, %s50
    %s70 = sphi 0, %s70
    %s72 = sphi 0, %s70
    %s73 = sphi 0, %s72
    %s87 = sphi 0, %s73
    %s91 = sphi 0, %s91
    %s93 = sphi 0, %s91
    %s94 = sphi 0, %s93
    %s108 = sphi 0, %s94
    %s114 = sphi 0, %s116
    %s117 = sphi 0, %s114
    %s118 = sphi 0, %s117
    %s134 = sphi 0, %s118
  $region4: #{forward.1} parent=0 // loop_header_branch
    %13 = sbr.rel (%p11) target = $region8
  $region5: #{forward.1} parent=0 // loop_body
    %s15 = ssub.s32 %s10, 1
    %s16 = ssub.s32 %s10, 2
    %s17 = sadd.s32 %s10, 1
    %s18 = ssub.s32 %s10, %s17
    %p19 = scmp.eq.s32.totalorder %s18, 0
    %s21 = sadd.s32 %s20, 1
    %s22 = scalar_select %p19, %s20, %s21
    %p25 = pneg %p19
    %p26 = scmp.eq.s32.totalorder %s10, 1
    %p27 = por %p25, %p26
    %p28 = scmp.ne.s32.totalorder %s20, %s23
    %p29 = scmp.eq.s32.totalorder %s10, 0
    %p30 = por %p28, %p29
    %p31 = scmp.ne.s32.totalorder %s20, %s23
    %p32 = scmp.eq.s32.totalorder %s15, 1
    %p33 = por %p31, %p32
    %p34 = scmp.ne.s32.totalorder %s23, %s24
    %p35 = scmp.eq.s32.totalorder %s15, 0
    %p36 = por %p34, %p35
    %p37 = scmp.ne.s32.totalorder %s23, %s24
    %p38 = scmp.eq.s32.totalorder %s16, 1
    %p39 = por %p37, %p38
    %p41 = scmp.ne.s32.totalorder %s24, %s40
    %p42 = scmp.eq.s32.totalorder %s16, 0
    %p43 = por %p41, %p42
    %s44 = ssub.s32 %s10, %s17
    %p45 = scmp.eq.s32.totalorder %s44, 0
    %s47 = sadd.s32 %s46, 1
    %s48 = scalar_select %p45, %s46, %s47
    %p51 = pneg %p45
    %p52 = scmp.eq.s32.totalorder %s10, 1
    %p53 = por %p51, %p52
    %p54 = scmp.ne.s32.totalorder %s46, %s49
    %p55 = scmp.eq.s32.totalorder %s10, 0
    %p56 = por %p54, %p55
    %p57 = scmp.ne.s32.totalorder %s46, %s49
    %p58 = scmp.eq.s32.totalorder %s15, 1
    %p59 = por %p57, %p58
    %p60 = scmp.ne.s32.totalorder %s49, %s50
    %p61 = scmp.eq.s32.totalorder %s15, 0
    %p62 = por %p60, %p61
    %p63 = scmp.ne.s32.totalorder %s49, %s50
    %p64 = scmp.eq.s32.totalorder %s16, 1
    %p65 = por %p63, %p64
    %p67 = scmp.ne.s32.totalorder %s50, %s66
    %p68 = scmp.eq.s32.totalorder %s16, 0
    %p69 = por %p67, %p68
    %s71 = sadd.s32 %s70, 1
    %p74 = scmp.eq.s32.totalorder %s10, 1
    %p75 = scmp.ne.s32.totalorder %s70, %s72
    %p76 = scmp.eq.s32.totalorder %s10, 0
    %p77 = por %p75, %p76
    %p78 = scmp.ne.s32.totalorder %s70, %s72
    %p79 = scmp.eq.s32.totalorder %s15, 1
    %p80 = por %p78, %p79
    %p81 = scmp.ne.s32.totalorder %s72, %s73
    %p82 = scmp.eq.s32.totalorder %s15, 0
    %p83 = por %p81, %p82
    %p84 = scmp.ne.s32.totalorder %s72, %s73
    %p85 = scmp.eq.s32.totalorder %s16, 1
    %p86 = por %p84, %p85
    %p88 = scmp.ne.s32.totalorder %s73, %s87
    %p89 = scmp.eq.s32.totalorder %s16, 0
    %p90 = por %p88, %p89
    %s92 = sadd.s32 %s91, 1
    %p95 = scmp.eq.s32.totalorder %s10, 1
    %p96 = scmp.ne.s32.totalorder %s91, %s93
    %p97 = scmp.eq.s32.totalorder %s10, 0
    %p98 = por %p96, %p97
    %p99 = scmp.ne.s32.totalorder %s91, %s93
    %p100 = scmp.eq.s32.totalorder %s15, 1
    %p101 = por %p99, %p100
    %p102 = scmp.ne.s32.totalorder %s93, %s94
    %p103 = scmp.eq.s32.totalorder %s15, 0
    %p104 = por %p102, %p103
    %p105 = scmp.ne.s32.totalorder %s93, %s94
    %p106 = scmp.eq.s32.totalorder %s16, 1
    %p107 = por %p105, %p106
    %p109 = scmp.ne.s32.totalorder %s94, %s108
    %p110 = scmp.eq.s32.totalorder %s16, 0
    %p111 = por %p109, %p110
    %s112 = ssub.s32 %s10, %s17
    %p113 = scmp.eq.s32.totalorder %s112, 0
    %s115 = sadd.s32 %s114, 1
    %s116 = scalar_select %p113, %s114, %s115
    %p119 = pneg %p113
    %p120 = scmp.eq.s32.totalorder %s10, 1
    %p121 = por %p119, %p120
    %p122 = scmp.ne.s32.totalorder %s114, %s117
    %p123 = scmp.eq.s32.totalorder %s10, 0
    %p124 = por %p122, %p123
    %p125 = scmp.ne.s32.totalorder %s114, %s117
    %p126 = scmp.eq.s32.totalorder %s15, 1
    %p127 = por %p125, %p126
    %p128 = scmp.ne.s32.totalorder %s117, %s118
    %p129 = scmp.eq.s32.totalorder %s15, 0
    %p130 = por %p128, %p129
    %p131 = scmp.ne.s32.totalorder %s117, %s118
    %p132 = scmp.eq.s32.totalorder %s16, 1
    %p133 = por %p131, %p132
    %p135 = scmp.ne.s32.totalorder %s118, %s134
    %p136 = scmp.eq.s32.totalorder %s16, 0
    %p137 = por %p135, %p136
    %p138 = scmp.le.s32.totalorder 1, %s10
    %p139 = scmp.lt.s32.totalorder %s10, 3
    %p140 = pnand %p138, %p139
    %p141 = pneg %p140
    // Predicated region
    $region9: #{forward.1} parent=5 // pred_check
      _
    $region10: #{forward.1} parent=5 // pred_check_branch
      %143 = sbr.rel (%p140) target = $region12
    $region11: #{forward.1} parent=5 // pred_region
      %s144 = ssub.s32 %s10, 1
      // Predicated region
      $region13: #{forward.1} parent=11 // pred_check
        %p145 = pneg %p83
      $region14: #{forward.1} parent=11 // pred_check_branch
        %147 = sbr.rel (%p145) target = $region16
      $region15: #{forward.1} parent=11 // pred_region
        _
      $region16: #{forward.1} parent=11 // pred_fallthru
        _
      // Predicated region
      $region17: #{forward.1} parent=11 // pred_check
        %p148 = pneg %p104
      $region18: #{forward.1} parent=11 // pred_check_branch
        %150 = sbr.rel (%p148) target = $region20
      $region19: #{forward.1} parent=11 // pred_region
        _
      $region20: #{forward.1} parent=11 // pred_fallthru
        _
    $region12: #{forward.1} parent=5 // pred_fallthru
      _
    %p151 = scmp.lt.s32.totalorder %s10, 2
    // Predicated region
    $region21: #{forward.1} parent=5 // pred_check
      %p152 = pneg %p151
    $region22: #{forward.1} parent=5 // pred_check_branch
      %154 = sbr.rel (%p152) target = $region24
    $region23: #{forward.1} parent=5 // pred_region
      // Predicated region
      $region25: #{forward.1} parent=23 // pred_check
        %p155 = pneg %p30
      $region26: #{forward.1} parent=23 // pred_check_branch
        %157 = sbr.rel (%p155) target = $region28
      $region27: #{forward.1} parent=23 // pred_region
        %s158 = smul.u32 64, %s10
        %p159 = scmp.lt.s32.totalorder %s158, 127
        %s160 = scalar_select %p159, %s158, 127
        %s161 = smul.addr %s160, 8
        %s162 = scalar_lea.vmem %s0, %s161
        %s163 = smul.u32 64, %s10
      $region28: #{forward.1} parent=23 // pred_fallthru
        _
      // Predicated region
      $region29: #{forward.1} parent=23 // pred_check
        %p164 = pneg %p56
      $region30: #{forward.1} parent=23 // pred_check_branch
        %166 = sbr.rel (%p164) target = $region32
      $region31: #{forward.1} parent=23 // pred_region
        %s167 = smul.u32 64, %s10
        %p168 = scmp.lt.s32.totalorder %s167, 127
        %s169 = scalar_select %p168, %s167, 127
        %s170 = smul.addr %s169, 8
        %s171 = scalar_lea.vmem %s1, %s170
        %s172 = smul.u32 64, %s10
      $region32: #{forward.1} parent=23 // pred_fallthru
        _
    $region24: #{forward.1} parent=5 // pred_fallthru
      _
    %p173 = scmp.le.s32.totalorder 1, %s10
    %p174 = scmp.lt.s32.totalorder %s10, 3
    %p175 = pnand %p173, %p174
    %p176 = pneg %p175
    // Predicated region
    $region33: #{forward.1} parent=5 // pred_check
      _
    $region34: #{forward.1} parent=5 // pred_check_branch
      %178 = sbr.rel (%p175) target = $region36
    $region35: #{forward.1} parent=5 // pred_region
      %s179 = ssub.s32 %s10, 1
      %s180 = smul.u32 64, %s15
      %p181 = scmp.lt.s32.totalorder %s180, 127
      %s182 = scalar_select %p181, %s180, 127
      %s183 = smul.addr %s182, 8
      %s184 = scalar_lea.vmem %s0, %s183
      %p185 = pneg %p36
      %p186 = pneg %p33
      %s187 = smul.u32 64, %s15
      %p188 = scmp.lt.s32.totalorder %s187, 127
      %s189 = scalar_select %p188, %s187, 127
      %s190 = smul.addr %s189, 8
      %s191 = scalar_lea.vmem %s1, %s190
      %p192 = pneg %p62
      %p193 = pneg %p59
      %p194 = pneg %p83
      %p195 = pneg %p80
      %p196 = pneg %p104
      %p197 = pneg %p101
      %p198 = pneg %p130
      %p199 = pneg %p127
      %s200 = smul.u32 64, %s15
      %p201 = scmp.lt.s32.totalorder %s200, 127
      %s202 = scalar_select %p201, %s200, 127
      %s203 = smul.addr %s202, 4
      %s204 = scalar_lea.vmem %s4, %s203
      %s205 = smul.u32 64, %s15
      %p206 = scmp.lt.s32.totalorder %s205, 127
      %s207 = scalar_select %p206, %s205, 127
      %s208 = smul.addr %s207, 8
      %s209 = scalar_lea.vmem %s0, %s208
      %s210 = smul.u32 64, %s15
      %s211 = smul.u32 64, %s15
      %p212 = scmp.lt.s32.totalorder %s211, 127
      %s213 = scalar_select %p212, %s211, 127
      %s214 = smul.addr %s213, 8
      %s215 = scalar_lea.vmem %s1, %s214
      %s216 = smul.u32 64, %s15
      %s217 = smul.u32 64, %s15
      %p218 = scmp.lt.s32.totalorder %s217, 127
      %s219 = scalar_select %p218, %s217, 127
      %s220 = smul.addr %s219, 4
      %s221 = scalar_lea.vmem %s4, %s220
      %s222 = smul.u32 64, %s15
      %v224 = vld [vmem:[%s209] sm:$0xff]
      %v225 = vld [vmem:[%s209 + $0x8] sm:$0xff]
      %v226 = vld [vmem:[%s209 + $0x10] sm:$0xff]
      %v227 = vld [vmem:[%s209 + $0x18] sm:$0xff]
      %v228 = vld [vmem:[%s209 + $0x20] sm:$0xff]
      %v229 = vld [vmem:[%s209 + $0x28] sm:$0xff]
      %v230 = vld [vmem:[%s209 + $0x30] sm:$0xff]
      %v231 = vld [vmem:[%s209 + $0x38] sm:$0xff]
      %v232 = vld [vmem:[%s209 + $0x40] sm:$0xff]
      %v233 = vld [vmem:[%s209 + $0x48] sm:$0xff]
      %v234 = vld [vmem:[%s209 + $0x50] sm:$0xff]
      %v235 = vld [vmem:[%s209 + $0x58] sm:$0xff]
      %v236 = vld [vmem:[%s209 + $0x60] sm:$0xff]
      %v237 = vld [vmem:[%s209 + $0x68] sm:$0xff]
      %v238 = vld [vmem:[%s209 + $0x70] sm:$0xff]
      %v239 = vld [vmem:[%s209 + $0x78] sm:$0xff]
      %v240 = vld [vmem:[%s209 + $0x80] sm:$0xff]
      %v241 = vld [vmem:[%s209 + $0x88] sm:$0xff]
      %v242 = vld [vmem:[%s209 + $0x90] sm:$0xff]
      %v243 = vld [vmem:[%s209 + $0x98] sm:$0xff]
      %v244 = vld [vmem:[%s209 + $0xa0] sm:$0xff]
      %v245 = vld [vmem:[%s209 + $0xa8] sm:$0xff]
      %v246 = vld [vmem:[%s209 + $0xb0] sm:$0xff]
      %v247 = vld [vmem:[%s209 + $0xb8] sm:$0xff]
      %v248 = vld [vmem:[%s209 + $0xc0] sm:$0xff]
      %v249 = vld [vmem:[%s209 + $0xc8] sm:$0xff]
      %v250 = vld [vmem:[%s209 + $0xd0] sm:$0xff]
      %v251 = vld [vmem:[%s209 + $0xd8] sm:$0xff]
      %v252 = vld [vmem:[%s209 + $0xe0] sm:$0xff]
      %v253 = vld [vmem:[%s209 + $0xe8] sm:$0xff]
      %v254 = vld [vmem:[%s209 + $0xf0] sm:$0xff]
      %v255 = vld [vmem:[%s209 + $0xf8] sm:$0xff]
      %v256 = vld [vmem:[%s209 + $0x100] sm:$0xff]
      %v257 = vld [vmem:[%s209 + $0x108] sm:$0xff]
      %v258 = vld [vmem:[%s209 + $0x110] sm:$0xff]
      %v259 = vld [vmem:[%s209 + $0x118] sm:$0xff]
      %v260 = vld [vmem:[%s209 + $0x120] sm:$0xff]
      %v261 = vld [vmem:[%s209 + $0x128] sm:$0xff]
      %v262 = vld [vmem:[%s209 + $0x130] sm:$0xff]
      %v263 = vld [vmem:[%s209 + $0x138] sm:$0xff]
      %v264 = vld [vmem:[%s209 + $0x140] sm:$0xff]
      %v265 = vld [vmem:[%s209 + $0x148] sm:$0xff]
      %v266 = vld [vmem:[%s209 + $0x150] sm:$0xff]
      %v267 = vld [vmem:[%s209 + $0x158] sm:$0xff]
      %v268 = vld [vmem:[%s209 + $0x160] sm:$0xff]
      %v269 = vld [vmem:[%s209 + $0x168] sm:$0xff]
      %v270 = vld [vmem:[%s209 + $0x170] sm:$0xff]
      %v271 = vld [vmem:[%s209 + $0x178] sm:$0xff]
      %v272 = vld [vmem:[%s209 + $0x180] sm:$0xff]
      %v273 = vld [vmem:[%s209 + $0x188] sm:$0xff]
      %v274 = vld [vmem:[%s209 + $0x190] sm:$0xff]
      %v275 = vld [vmem:[%s209 + $0x198] sm:$0xff]
      %v276 = vld [vmem:[%s209 + $0x1a0] sm:$0xff]
      %v277 = vld [vmem:[%s209 + $0x1a8] sm:$0xff]
      %v278 = vld [vmem:[%s209 + $0x1b0] sm:$0xff]
      %v279 = vld [vmem:[%s209 + $0x1b8] sm:$0xff]
      %v280 = vld [vmem:[%s209 + $0x1c0] sm:$0xff]
      %v281 = vld [vmem:[%s209 + $0x1c8] sm:$0xff]
      %v282 = vld [vmem:[%s209 + $0x1d0] sm:$0xff]
      %v283 = vld [vmem:[%s209 + $0x1d8] sm:$0xff]
      %v284 = vld [vmem:[%s209 + $0x1e0] sm:$0xff]
      %v285 = vld [vmem:[%s209 + $0x1e8] sm:$0xff]
      %v286 = vld [vmem:[%s209 + $0x1f0] sm:$0xff]
      %v287 = vld [vmem:[%s209 + $0x1f8] sm:$0xff]
      %v288 = vpack.c.bf16 %v225, %v224
      %v289 = vpack.c.bf16 %v227, %v226
      %v290 = vpack.c.bf16 %v229, %v228
      %v291 = vpack.c.bf16 %v231, %v230
      %v292 = vpack.c.bf16 %v233, %v232
      %v293 = vpack.c.bf16 %v235, %v234
      %v294 = vpack.c.bf16 %v237, %v236
      %v295 = vpack.c.bf16 %v239, %v238
      %v296 = vpack.c.bf16 %v241, %v240
      %v297 = vpack.c.bf16 %v243, %v242
      %v298 = vpack.c.bf16 %v245, %v244
      %v299 = vpack.c.bf16 %v247, %v246
      %v300 = vpack.c.bf16 %v249, %v248
      %v301 = vpack.c.bf16 %v251, %v250
      %v302 = vpack.c.bf16 %v253, %v252
      %v303 = vpack.c.bf16 %v255, %v254
      %v304 = vpack.c.bf16 %v257, %v256
      %v305 = vpack.c.bf16 %v259, %v258
      %v306 = vpack.c.bf16 %v261, %v260
      %v307 = vpack.c.bf16 %v263, %v262
      %v308 = vpack.c.bf16 %v265, %v264
      %v309 = vpack.c.bf16 %v267, %v266
      %v310 = vpack.c.bf16 %v269, %v268
      %v311 = vpack.c.bf16 %v271, %v270
      %v312 = vpack.c.bf16 %v273, %v272
      %v313 = vpack.c.bf16 %v275, %v274
      %v314 = vpack.c.bf16 %v277, %v276
      %v315 = vpack.c.bf16 %v279, %v278
      %v316 = vpack.c.bf16 %v281, %v280
      %v317 = vpack.c.bf16 %v283, %v282
      %v318 = vpack.c.bf16 %v285, %v284
      %v319 = vpack.c.bf16 %v287, %v286
      %v320 = vld [vmem:[%s215] sm:$0xff]
      %v321 = vld [vmem:[%s215 + $0x8] sm:$0xff]
      %v322 = vld [vmem:[%s215 + $0x10] sm:$0xff]
      %v323 = vld [vmem:[%s215 + $0x18] sm:$0xff]
      %v324 = vld [vmem:[%s215 + $0x20] sm:$0xff]
      %v325 = vld [vmem:[%s215 + $0x28] sm:$0xff]
      %v326 = vld [vmem:[%s215 + $0x30] sm:$0xff]
      %v327 = vld [vmem:[%s215 + $0x38] sm:$0xff]
      %v328 = vld [vmem:[%s215 + $0x40] sm:$0xff]
      %v329 = vld [vmem:[%s215 + $0x48] sm:$0xff]
      %v330 = vld [vmem:[%s215 + $0x50] sm:$0xff]
      %v331 = vld [vmem:[%s215 + $0x58] sm:$0xff]
      %v332 = vld [vmem:[%s215 + $0x60] sm:$0xff]
      %v333 = vld [vmem:[%s215 + $0x68] sm:$0xff]
      %v334 = vld [vmem:[%s215 + $0x70] sm:$0xff]
      %v335 = vld [vmem:[%s215 + $0x78] sm:$0xff]
      %v336 = vld [vmem:[%s215 + $0x80] sm:$0xff]
      %v337 = vld [vmem:[%s215 + $0x88] sm:$0xff]
      %v338 = vld [vmem:[%s215 + $0x90] sm:$0xff]
      %v339 = vld [vmem:[%s215 + $0x98] sm:$0xff]
      %v340 = vld [vmem:[%s215 + $0xa0] sm:$0xff]
      %v341 = vld [vmem:[%s215 + $0xa8] sm:$0xff]
      %v342 = vld [vmem:[%s215 + $0xb0] sm:$0xff]
      %v343 = vld [vmem:[%s215 + $0xb8] sm:$0xff]
      %v344 = vld [vmem:[%s215 + $0xc0] sm:$0xff]
      %v345 = vld [vmem:[%s215 + $0xc8] sm:$0xff]
      %v346 = vld [vmem:[%s215 + $0xd0] sm:$0xff]
      %v347 = vld [vmem:[%s215 + $0xd8] sm:$0xff]
      %v348 = vld [vmem:[%s215 + $0xe0] sm:$0xff]
      %v349 = vld [vmem:[%s215 + $0xe8] sm:$0xff]
      %v350 = vld [vmem:[%s215 + $0xf0] sm:$0xff]
      %v351 = vld [vmem:[%s215 + $0xf8] sm:$0xff]
      %v352 = vld [vmem:[%s215 + $0x100] sm:$0xff]
      %v353 = vld [vmem:[%s215 + $0x108] sm:$0xff]
      %v354 = vld [vmem:[%s215 + $0x110] sm:$0xff]
      %v355 = vld [vmem:[%s215 + $0x118] sm:$0xff]
      %v356 = vld [vmem:[%s215 + $0x120] sm:$0xff]
      %v357 = vld [vmem:[%s215 + $0x128] sm:$0xff]
      %v358 = vld [vmem:[%s215 + $0x130] sm:$0xff]
      %v359 = vld [vmem:[%s215 + $0x138] sm:$0xff]
      %v360 = vld [vmem:[%s215 + $0x140] sm:$0xff]
      %v361 = vld [vmem:[%s215 + $0x148] sm:$0xff]
      %v362 = vld [vmem:[%s215 + $0x150] sm:$0xff]
      %v363 = vld [vmem:[%s215 + $0x158] sm:$0xff]
      %v364 = vld [vmem:[%s215 + $0x160] sm:$0xff]
      %v365 = vld [vmem:[%s215 + $0x168] sm:$0xff]
      %v366 = vld [vmem:[%s215 + $0x170] sm:$0xff]
      %v367 = vld [vmem:[%s215 + $0x178] sm:$0xff]
      %v368 = vld [vmem:[%s215 + $0x180] sm:$0xff]
      %v369 = vld [vmem:[%s215 + $0x188] sm:$0xff]
      %v370 = vld [vmem:[%s215 + $0x190] sm:$0xff]
      %v371 = vld [vmem:[%s215 + $0x198] sm:$0xff]
      %v372 = vld [vmem:[%s215 + $0x1a0] sm:$0xff]
      %v373 = vld [vmem:[%s215 + $0x1a8] sm:$0xff]
      %v374 = vld [vmem:[%s215 + $0x1b0] sm:$0xff]
      %v375 = vld [vmem:[%s215 + $0x1b8] sm:$0xff]
      %v376 = vld [vmem:[%s215 + $0x1c0] sm:$0xff]
      %v377 = vld [vmem:[%s215 + $0x1c8] sm:$0xff]
      %v378 = vld [vmem:[%s215 + $0x1d0] sm:$0xff]
      %v379 = vld [vmem:[%s215 + $0x1d8] sm:$0xff]
      %v380 = vld [vmem:[%s215 + $0x1e0] sm:$0xff]
      %v381 = vld [vmem:[%s215 + $0x1e8] sm:$0xff]
      %v382 = vld [vmem:[%s215 + $0x1f0] sm:$0xff]
      %v383 = vld [vmem:[%s215 + $0x1f8] sm:$0xff]
      %v384 = vpack.c.bf16 %v321, %v320
      %v385 = vpack.c.bf16 %v323, %v322
      %v386 = vpack.c.bf16 %v325, %v324
      %v387 = vpack.c.bf16 %v327, %v326
      %v388 = vpack.c.bf16 %v329, %v328
      %v389 = vpack.c.bf16 %v331, %v330
      %v390 = vpack.c.bf16 %v333, %v332
      %v391 = vpack.c.bf16 %v335, %v334
      %v392 = vpack.c.bf16 %v337, %v336
      %v393 = vpack.c.bf16 %v339, %v338
      %v394 = vpack.c.bf16 %v341, %v340
      %v395 = vpack.c.bf16 %v343, %v342
      %v396 = vpack.c.bf16 %v345, %v344
      %v397 = vpack.c.bf16 %v347, %v346
      %v398 = vpack.c.bf16 %v349, %v348
      %v399 = vpack.c.bf16 %v351, %v350
      %v400 = vpack.c.bf16 %v353, %v352
      %v401 = vpack.c.bf16 %v355, %v354
      %v402 = vpack.c.bf16 %v357, %v356
      %v403 = vpack.c.bf16 %v359, %v358
      %v404 = vpack.c.bf16 %v361, %v360
      %v405 = vpack.c.bf16 %v363, %v362
      %v406 = vpack.c.bf16 %v365, %v364
      %v407 = vpack.c.bf16 %v367, %v366
      %v408 = vpack.c.bf16 %v369, %v368
      %v409 = vpack.c.bf16 %v371, %v370
      %v410 = vpack.c.bf16 %v373, %v372
      %v411 = vpack.c.bf16 %v375, %v374
      %v412 = vpack.c.bf16 %v377, %v376
      %v413 = vpack.c.bf16 %v379, %v378
      %v414 = vpack.c.bf16 %v381, %v380
      %v415 = vpack.c.bf16 %v383, %v382
      %v416 = vld [vmem:[%s2] sm:$0xf]
      %v417 = vld [vmem:[%s2 + $0x4] sm:$0xf]
      %v418 = vld [vmem:[%s2 + $0x40] sm:$0xf]
      %v419 = vld [vmem:[%s2 + $0x44] sm:$0xf]
      %v420 = vld [vmem:[%s2 + $0x48] sm:$0xf]
      %v421 = vld [vmem:[%s2 + $0x4c] sm:$0xf]
      %v422 = vld [vmem:[%s2 + $0x50] sm:$0xf]
      %v423 = vld [vmem:[%s2 + $0x54] sm:$0xf]
      %v424 = vld [vmem:[%s2 + $0x58] sm:$0xf]
      %v425 = vld [vmem:[%s2 + $0x5c] sm:$0xf]
      %v426 = vld [vmem:[%s2 + $0x60] sm:$0xf]
      %v427 = vld [vmem:[%s2 + $0x64] sm:$0xf]
      %v428 = vld [vmem:[%s2 + $0x68] sm:$0xf]
      %v429 = vld [vmem:[%s2 + $0x6c] sm:$0xf]
      %v430 = vld [vmem:[%s2 + $0x70] sm:$0xf]
      %v431 = vld [vmem:[%s2 + $0x74] sm:$0xf]
      %v432 = vld [vmem:[%s2 + $0x78] sm:$0xf]
      %v433 = vld [vmem:[%s2 + $0x7c] sm:$0xf]
      %v434 = vld [vmem:[%s2 + $0x80] sm:$0xf]
      %v435 = vld [vmem:[%s2 + $0x84] sm:$0xf]
      %v436 = vld [vmem:[%s2 + $0x88] sm:$0xf]
      %v437 = vld [vmem:[%s2 + $0x8c] sm:$0xf]
      %v438 = vld [vmem:[%s2 + $0x90] sm:$0xf]
      %v439 = vld [vmem:[%s2 + $0x94] sm:$0xf]
      %v440 = vld [vmem:[%s2 + $0x98] sm:$0xf]
      %v441 = vld [vmem:[%s2 + $0x9c] sm:$0xf]
      %v442 = vld [vmem:[%s2 + $0xa0] sm:$0xf]
      %v443 = vld [vmem:[%s2 + $0xa4] sm:$0xf]
      %v444 = vld [vmem:[%s2 + $0xa8] sm:$0xf]
      %v445 = vld [vmem:[%s2 + $0xac] sm:$0xf]
      %v446 = vld [vmem:[%s2 + $0xb0] sm:$0xf]
      %v447 = vld [vmem:[%s2 + $0xb4] sm:$0xf]
      %v448 = vld [vmem:[%s2 + $0xb8] sm:$0xf]
      %v449 = vld [vmem:[%s2 + $0xbc] sm:$0xf]
      %v450 = vld [vmem:[%s2 + $0xc0] sm:$0x3]
      %v451 = vld [vmem:[%s2 + $0x100] sm:$0xf]
      %v452 = vld [vmem:[%s2 + $0x104] sm:$0xf]
      %v453 = vld [vmem:[%s2 + $0x108] sm:$0xf]
      %v454 = vld [vmem:[%s2 + $0x10c] sm:$0xf]
      %v455 = vld [vmem:[%s2 + $0x110] sm:$0xf]
      %v456 = vld [vmem:[%s2 + $0x114] sm:$0xf]
      %v457 = vld [vmem:[%s2 + $0x118] sm:$0xf]
      %v458 = vld [vmem:[%s2 + $0x11c] sm:$0xf]
      %v459 = vld [vmem:[%s2 + $0x120] sm:$0xf]
      %v460 = vld [vmem:[%s2 + $0x124] sm:$0xf]
      %v461 = vld [vmem:[%s2 + $0x128] sm:$0xf]
      %v462 = vld [vmem:[%s2 + $0x12c] sm:$0xf]
      %v463 = vld [vmem:[%s2 + $0x130] sm:$0xf]
      %v464 = vld [vmem:[%s2 + $0x134] sm:$0xf]
      %v465 = vld [vmem:[%s2 + $0x138] sm:$0xf]
      %v466 = vld [vmem:[%s2 + $0x13c] sm:$0xf]
      %v467 = vld [vmem:[%s3] sm:$0x1]
      %v468 = vld [vmem:[%s3 + $0x1] sm:$0x1]
      %v469 = vld [vmem:[%s3 + $0x2] sm:$0x1]
      %v470 = vld [vmem:[%s3 + $0x3] sm:$0x1]
      %v471 = vperm.slane %v467, 0
      %v474 = vunpack.c.l.b16 %v416
      %v475 = vunpack.c.l.b16 %v417
      %v476 = vpack.c.b16 %v475, %v474
      %vm478 = vcmask 130048
      %v480 = vsel %vm478, %v288, 0
      %v483 = vsel %vm478, %v289, 0
      %v486 = vsel %vm478, %v290, 0
      %v489 = vsel %vm478, %v291, 0
      %v492 = vsel %vm478, %v292, 0
      %v495 = vsel %vm478, %v293, 0
      %v498 = vsel %vm478, %v294, 0
      %v501 = vsel %vm478, %v295, 0
      %v504 = vsel %vm478, %v296, 0
      %v507 = vsel %vm478, %v297, 0
      %v510 = vsel %vm478, %v298, 0
      %v513 = vsel %vm478, %v299, 0
      %v516 = vsel %vm478, %v300, 0
      %v519 = vsel %vm478, %v301, 0
      %v522 = vsel %vm478, %v302, 0
      %v525 = vsel %vm478, %v303, 0
      %v528 = vsel %vm478, %v304, 0
      %v531 = vsel %vm478, %v305, 0
      %v534 = vsel %vm478, %v306, 0
      %v537 = vsel %vm478, %v307, 0
      %v540 = vsel %vm478, %v308, 0
      %v543 = vsel %vm478, %v309, 0
      %v546 = vsel %vm478, %v310, 0
      %v549 = vsel %vm478, %v311, 0
      %v552 = vsel %vm478, %v312, 0
      %v555 = vsel %vm478, %v313, 0
      %v558 = vsel %vm478, %v314, 0
      %v561 = vsel %vm478, %v315, 0
      %v564 = vsel %vm478, %v316, 0
      %v567 = vsel %vm478, %v317, 0
      %v570 = vsel %vm478, %v318, 0
      %v573 = vsel %vm478, %v319, 0
      %575 = vmatpush.bf16.msra.mxu0 0
      %576 = vmatpush.bf16.msra.mxu0 0
      %577 = vmatpush.bf16.msra.mxu0 0
      %578 = vmatpush.bf16.msra.mxu0 0
      %579 = vmatpush.bf16.msra.mxu0 0
      %580 = vmatpush.bf16.msra.mxu0 0
      %581 = vmatpush.bf16.msra.mxu0 0
      %582 = vmatpush.bf16.msra.mxu0 %v476
      %583 = vmatmul.bf16.gmra.mxu0 %v480
      %v584 = vpop.f32.mrf.mxu0
      %v585 = vadd.f32 %v471, %v584
      %v586 = vpop.f32.mrf.mxu0
      %v587 = vadd.f32 %v471, %v586
      %588 = vmatmul.bf16.gmra.mxu0 %v483
      %v589 = vpop.f32.mrf.mxu0
      %v590 = vadd.f32 %v471, %v589
      %v591 = vpop.f32.mrf.mxu0
      %v592 = vadd.f32 %v471, %v591
      %593 = vmatmul.bf16.gmra.mxu0 %v486
      %v594 = vpop.f32.mrf.mxu0
      %v595 = vadd.f32 %v471, %v594
      %v596 = vpop.f32.mrf.mxu0
      %v597 = vadd.f32 %v471, %v596
      %598 = vmatmul.bf16.gmra.mxu0 %v489
      %v599 = vpop.f32.mrf.mxu0
      %v600 = vadd.f32 %v471, %v599
      %v601 = vpop.f32.mrf.mxu0
      %v602 = vadd.f32 %v471, %v601
      %603 = vmatmul.bf16.gmra.mxu0 %v492
      %v604 = vpop.f32.mrf.mxu0
      %v605 = vadd.f32 %v471, %v604
      %v606 = vpop.f32.mrf.mxu0
      %v607 = vadd.f32 %v471, %v606
      %608 = vmatmul.bf16.gmra.mxu0 %v495
      %v609 = vpop.f32.mrf.mxu0
      %v610 = vadd.f32 %v471, %v609
      %v611 = vpop.f32.mrf.mxu0
      %v612 = vadd.f32 %v471, %v611
      %613 = vmatmul.bf16.gmra.mxu0 %v498
      %v614 = vpop.f32.mrf.mxu0
      %v615 = vadd.f32 %v471, %v614
      %v616 = vpop.f32.mrf.mxu0
      %v617 = vadd.f32 %v471, %v616
      %618 = vmatmul.bf16.gmra.mxu0 %v501
      %v619 = vpop.f32.mrf.mxu0
      %v620 = vadd.f32 %v471, %v619
      %v621 = vpop.f32.mrf.mxu0
      %v622 = vadd.f32 %v471, %v621
      %623 = vmatmul.bf16.gmra.mxu0 %v504
      %v624 = vpop.f32.mrf.mxu0
      %v625 = vadd.f32 %v471, %v624
      %v626 = vpop.f32.mrf.mxu0
      %v627 = vadd.f32 %v471, %v626
      %628 = vmatmul.bf16.gmra.mxu0 %v507
      %v629 = vpop.f32.mrf.mxu0
      %v630 = vadd.f32 %v471, %v629
      %v631 = vpop.f32.mrf.mxu0
      %v632 = vadd.f32 %v471, %v631
      %633 = vmatmul.bf16.gmra.mxu0 %v510
      %v634 = vpop.f32.mrf.mxu0
      %v635 = vadd.f32 %v471, %v634
      %v636 = vpop.f32.mrf.mxu0
      %v637 = vadd.f32 %v471, %v636
      %638 = vmatmul.bf16.gmra.mxu0 %v513
      %v639 = vpop.f32.mrf.mxu0
      %v640 = vadd.f32 %v471, %v639
      %v641 = vpop.f32.mrf.mxu0
      %v642 = vadd.f32 %v471, %v641
      %643 = vmatmul.bf16.gmra.mxu0 %v516
      %v644 = vpop.f32.mrf.mxu0
      %v645 = vadd.f32 %v471, %v644
      %v646 = vpop.f32.mrf.mxu0
      %v647 = vadd.f32 %v471, %v646
      %648 = vmatmul.bf16.gmra.mxu0 %v519
      %v649 = vpop.f32.mrf.mxu0
      %v650 = vadd.f32 %v471, %v649
      %v651 = vpop.f32.mrf.mxu0
      %v652 = vadd.f32 %v471, %v651
      %653 = vmatmul.bf16.gmra.mxu0 %v522
      %v654 = vpop.f32.mrf.mxu0
      %v655 = vadd.f32 %v471, %v654
      %v656 = vpop.f32.mrf.mxu0
      %v657 = vadd.f32 %v471, %v656
      %658 = vmatmul.bf16.gmra.mxu0 %v525
      %v659 = vpop.f32.mrf.mxu0
      %v660 = vadd.f32 %v471, %v659
      %v661 = vpop.f32.mrf.mxu0
      %v662 = vadd.f32 %v471, %v661
      %663 = vmatmul.bf16.gmra.mxu0 %v528
      %v664 = vpop.f32.mrf.mxu0
      %v665 = vadd.f32 %v471, %v664
      %v666 = vpop.f32.mrf.mxu0
      %v667 = vadd.f32 %v471, %v666
      %668 = vmatmul.bf16.gmra.mxu0 %v531
      %v669 = vpop.f32.mrf.mxu0
      %v670 = vadd.f32 %v471, %v669
      %v671 = vpop.f32.mrf.mxu0
      %v672 = vadd.f32 %v471, %v671
      %673 = vmatmul.bf16.gmra.mxu0 %v534
      %v674 = vpop.f32.mrf.mxu0
      %v675 = vadd.f32 %v471, %v674
      %v676 = vpop.f32.mrf.mxu0
      %v677 = vadd.f32 %v471, %v676
      %678 = vmatmul.bf16.gmra.mxu0 %v537
      %v679 = vpop.f32.mrf.mxu0
      %v680 = vadd.f32 %v471, %v679
      %v681 = vpop.f32.mrf.mxu0
      %v682 = vadd.f32 %v471, %v681
      %683 = vmatmul.bf16.gmra.mxu0 %v540
      %v684 = vpop.f32.mrf.mxu0
      %v685 = vadd.f32 %v471, %v684
      %v686 = vpop.f32.mrf.mxu0
      %v687 = vadd.f32 %v471, %v686
      %688 = vmatmul.bf16.gmra.mxu0 %v543
      %v689 = vpop.f32.mrf.mxu0
      %v690 = vadd.f32 %v471, %v689
      %v691 = vpop.f32.mrf.mxu0
      %v692 = vadd.f32 %v471, %v691
      %693 = vmatmul.bf16.gmra.mxu0 %v546
      %v694 = vpop.f32.mrf.mxu0
      %v695 = vadd.f32 %v471, %v694
      %v696 = vpop.f32.mrf.mxu0
      %v697 = vadd.f32 %v471, %v696
      %698 = vmatmul.bf16.gmra.mxu0 %v549
      %v699 = vpop.f32.mrf.mxu0
      %v700 = vadd.f32 %v471, %v699
      %v701 = vpop.f32.mrf.mxu0
      %v702 = vadd.f32 %v471, %v701
      %703 = vmatmul.bf16.gmra.mxu0 %v552
      %v704 = vpop.f32.mrf.mxu0
      %v705 = vadd.f32 %v471, %v704
      %v706 = vpop.f32.mrf.mxu0
      %v707 = vadd.f32 %v471, %v706
      %708 = vmatmul.bf16.gmra.mxu0 %v555
      %v709 = vpop.f32.mrf.mxu0
      %v710 = vadd.f32 %v471, %v709
      %v711 = vpop.f32.mrf.mxu0
      %v712 = vadd.f32 %v471, %v711
      %713 = vmatmul.bf16.gmra.mxu0 %v558
      %v714 = vpop.f32.mrf.mxu0
      %v715 = vadd.f32 %v471, %v714
      %v716 = vpop.f32.mrf.mxu0
      %v717 = vadd.f32 %v471, %v716
      %718 = vmatmul.bf16.gmra.mxu0 %v561
      %v719 = vpop.f32.mrf.mxu0
      %v720 = vadd.f32 %v471, %v719
      %v721 = vpop.f32.mrf.mxu0
      %v722 = vadd.f32 %v471, %v721
      %723 = vmatmul.bf16.gmra.mxu0 %v564
      %v724 = vpop.f32.mrf.mxu0
      %v725 = vadd.f32 %v471, %v724
      %v726 = vpop.f32.mrf.mxu0
      %v727 = vadd.f32 %v471, %v726
      %728 = vmatmul.bf16.gmra.mxu0 %v567
      %v729 = vpop.f32.mrf.mxu0
      %v730 = vadd.f32 %v471, %v729
      %v731 = vpop.f32.mrf.mxu0
      %v732 = vadd.f32 %v471, %v731
      %733 = vmatmul.bf16.gmra.mxu0 %v570
      %v734 = vpop.f32.mrf.mxu0
      %v735 = vadd.f32 %v471, %v734
      %v736 = vpop.f32.mrf.mxu0
      %v737 = vadd.f32 %v471, %v736
      %738 = vmatmul.bf16.gmra.mxu0 %v573
      %v739 = vpop.f32.mrf.mxu0
      %v740 = vadd.f32 %v471, %v739
      %v741 = vpop.f32.mrf.mxu0
      %v742 = vadd.f32 %v471, %v741
      %743 = vdwg.mxu0
      %v744 = vmax.f32 %v585, 0.0
      %v745 = vmax.f32 %v587, 0.0
      %v746 = vmax.f32 %v590, 0.0
      %v747 = vmax.f32 %v592, 0.0
      %v748 = vmax.f32 %v595, 0.0
      %v749 = vmax.f32 %v597, 0.0
      %v750 = vmax.f32 %v600, 0.0
      %v751 = vmax.f32 %v602, 0.0
      %v752 = vmax.f32 %v605, 0.0
      %v753 = vmax.f32 %v607, 0.0
      %v754 = vmax.f32 %v610, 0.0
      %v755 = vmax.f32 %v612, 0.0
      %v756 = vmax.f32 %v615, 0.0
      %v757 = vmax.f32 %v617, 0.0
      %v758 = vmax.f32 %v620, 0.0
      %v759 = vmax.f32 %v622, 0.0
      %v760 = vmax.f32 %v625, 0.0
      %v761 = vmax.f32 %v627, 0.0
      %v762 = vmax.f32 %v630, 0.0
      %v763 = vmax.f32 %v632, 0.0
      %v764 = vmax.f32 %v635, 0.0
      %v765 = vmax.f32 %v637, 0.0
      %v766 = vmax.f32 %v640, 0.0
      %v767 = vmax.f32 %v642, 0.0
      %v768 = vmax.f32 %v645, 0.0
      %v769 = vmax.f32 %v647, 0.0
      %v770 = vmax.f32 %v650, 0.0
      %v771 = vmax.f32 %v652, 0.0
      %v772 = vmax.f32 %v655, 0.0
      %v773 = vmax.f32 %v657, 0.0
      %v774 = vmax.f32 %v660, 0.0
      %v775 = vmax.f32 %v662, 0.0
      %v776 = vmax.f32 %v665, 0.0
      %v777 = vmax.f32 %v667, 0.0
      %v778 = vmax.f32 %v670, 0.0
      %v779 = vmax.f32 %v672, 0.0
      %v780 = vmax.f32 %v675, 0.0
      %v781 = vmax.f32 %v677, 0.0
      %v782 = vmax.f32 %v680, 0.0
      %v783 = vmax.f32 %v682, 0.0
      %v784 = vmax.f32 %v685, 0.0
      %v785 = vmax.f32 %v687, 0.0
      %v786 = vmax.f32 %v690, 0.0
      %v787 = vmax.f32 %v692, 0.0
      %v788 = vmax.f32 %v695, 0.0
      %v789 = vmax.f32 %v697, 0.0
      %v790 = vmax.f32 %v700, 0.0
      %v791 = vmax.f32 %v702, 0.0
      %v792 = vmax.f32 %v705, 0.0
      %v793 = vmax.f32 %v707, 0.0
      %v794 = vmax.f32 %v710, 0.0
      %v795 = vmax.f32 %v712, 0.0
      %v796 = vmax.f32 %v715, 0.0
      %v797 = vmax.f32 %v717, 0.0
      %v798 = vmax.f32 %v720, 0.0
      %v799 = vmax.f32 %v722, 0.0
      %v800 = vmax.f32 %v725, 0.0
      %v801 = vmax.f32 %v727, 0.0
      %v802 = vmax.f32 %v730, 0.0
      %v803 = vmax.f32 %v732, 0.0
      %v804 = vmax.f32 %v735, 0.0
      %v805 = vmax.f32 %v737, 0.0
      %v806 = vmax.f32 %v740, 0.0
      %v807 = vmax.f32 %v742, 0.0
      %v808 = vpack.c.bf16 %v745, %v744
      %v809 = vpack.c.bf16 %v747, %v746
      %v810 = vpack.c.bf16 %v749, %v748
      %v811 = vpack.c.bf16 %v751, %v750
      %v812 = vpack.c.bf16 %v753, %v752
      %v813 = vpack.c.bf16 %v755, %v754
      %v814 = vpack.c.bf16 %v757, %v756
      %v815 = vpack.c.bf16 %v759, %v758
      %v816 = vpack.c.bf16 %v761, %v760
      %v817 = vpack.c.bf16 %v763, %v762
      %v818 = vpack.c.bf16 %v765, %v764
      %v819 = vpack.c.bf16 %v767, %v766
      %v820 = vpack.c.bf16 %v769, %v768
      %v821 = vpack.c.bf16 %v771, %v770
      %v822 = vpack.c.bf16 %v773, %v772
      %v823 = vpack.c.bf16 %v775, %v774
      %v824 = vpack.c.bf16 %v777, %v776
      %v825 = vpack.c.bf16 %v779, %v778
      %v826 = vpack.c.bf16 %v781, %v780
      %v827 = vpack.c.bf16 %v783, %v782
      %v828 = vpack.c.bf16 %v785, %v784
      %v829 = vpack.c.bf16 %v787, %v786
      %v830 = vpack.c.bf16 %v789, %v788
      %v831 = vpack.c.bf16 %v791, %v790
      %v832 = vpack.c.bf16 %v793, %v792
      %v833 = vpack.c.bf16 %v795, %v794
      %v834 = vpack.c.bf16 %v797, %v796
      %v835 = vpack.c.bf16 %v799, %v798
      %v836 = vpack.c.bf16 %v801, %v800
      %v837 = vpack.c.bf16 %v803, %v802
      %v838 = vpack.c.bf16 %v805, %v804
      %v839 = vpack.c.bf16 %v807, %v806
      %v840 = vperm.slane %v468, 0
      %v857 = vunpack.c.l.b16 %v418
      %v858 = vunpack.c.l.b16 %v419
      %v859 = vunpack.c.l.b16 %v420
      %v860 = vunpack.c.l.b16 %v421
      %v861 = vunpack.c.l.b16 %v422
      %v862 = vunpack.c.l.b16 %v423
      %v863 = vunpack.c.l.b16 %v424
      %v864 = vunpack.c.l.b16 %v425
      %v865 = vunpack.c.l.b16 %v426
      %v866 = vunpack.c.l.b16 %v427
      %v867 = vunpack.c.l.b16 %v428
      %v868 = vunpack.c.l.b16 %v429
      %v869 = vunpack.c.l.b16 %v430
      %v870 = vunpack.c.l.b16 %v431
      %v871 = vunpack.c.l.b16 %v432
      %v872 = vunpack.c.l.b16 %v433
      %v873 = vpack.c.b16 %v858, %v857
      %v874 = vpack.c.b16 %v860, %v859
      %v875 = vpack.c.b16 %v862, %v861
      %v876 = vpack.c.b16 %v864, %v863
      %v877 = vpack.c.b16 %v866, %v865
      %v878 = vpack.c.b16 %v868, %v867
      %v879 = vpack.c.b16 %v870, %v869
      %v880 = vpack.c.b16 %v872, %v871
      %889 = vmatpush.bf16.msra.mxu0 %v880
      %890 = vmatpush.bf16.msra.mxu0 %v879
      %891 = vmatpush.bf16.msra.mxu0 %v878
      %892 = vmatpush.bf16.msra.mxu0 %v877
      %893 = vmatpush.bf16.msra.mxu0 %v876
      %894 = vmatpush.bf16.msra.mxu0 %v875
      %895 = vmatpush.bf16.msra.mxu0 %v874
      %896 = vmatpush.bf16.msra.mxu0 %v873
      %897 = vmatmul.bf16.gmra.mxu0 %v808
      %v898 = vpop.f32.mrf.mxu0
      %v899 = vadd.f32 %v840, %v898
      %v900 = vpop.f32.mrf.mxu0
      %v901 = vadd.f32 %v840, %v900
      %902 = vmatmul.bf16.gmra.mxu0 %v809
      %v903 = vpop.f32.mrf.mxu0
      %v904 = vadd.f32 %v840, %v903
      %v905 = vpop.f32.mrf.mxu0
      %v906 = vadd.f32 %v840, %v905
      %907 = vmatmul.bf16.gmra.mxu0 %v810
      %v908 = vpop.f32.mrf.mxu0
      %v909 = vadd.f32 %v840, %v908
      %v910 = vpop.f32.mrf.mxu0
      %v911 = vadd.f32 %v840, %v910
      %912 = vmatmul.bf16.gmra.mxu0 %v811
      %v913 = vpop.f32.mrf.mxu0
      %v914 = vadd.f32 %v840, %v913
      %v915 = vpop.f32.mrf.mxu0
      %v916 = vadd.f32 %v840, %v915
      %917 = vmatmul.bf16.gmra.mxu0 %v812
      %v918 = vpop.f32.mrf.mxu0
      %v919 = vadd.f32 %v840, %v918
      %v920 = vpop.f32.mrf.mxu0
      %v921 = vadd.f32 %v840, %v920
      %922 = vmatmul.bf16.gmra.mxu0 %v813
      %v923 = vpop.f32.mrf.mxu0
      %v924 = vadd.f32 %v840, %v923
      %v925 = vpop.f32.mrf.mxu0
      %v926 = vadd.f32 %v840, %v925
      %927 = vmatmul.bf16.gmra.mxu0 %v814
      %v928 = vpop.f32.mrf.mxu0
      %v929 = vadd.f32 %v840, %v928
      %v930 = vpop.f32.mrf.mxu0
      %v931 = vadd.f32 %v840, %v930
      %932 = vmatmul.bf16.gmra.mxu0 %v815
      %v933 = vpop.f32.mrf.mxu0
      %v934 = vadd.f32 %v840, %v933
      %v935 = vpop.f32.mrf.mxu0
      %v936 = vadd.f32 %v840, %v935
      %937 = vmatmul.bf16.gmra.mxu0 %v816
      %v938 = vpop.f32.mrf.mxu0
      %v939 = vadd.f32 %v840, %v938
      %v940 = vpop.f32.mrf.mxu0
      %v941 = vadd.f32 %v840, %v940
      %942 = vmatmul.bf16.gmra.mxu0 %v817
      %v943 = vpop.f32.mrf.mxu0
      %v944 = vadd.f32 %v840, %v943
      %v945 = vpop.f32.mrf.mxu0
      %v946 = vadd.f32 %v840, %v945
      %947 = vmatmul.bf16.gmra.mxu0 %v818
      %v948 = vpop.f32.mrf.mxu0
      %v949 = vadd.f32 %v840, %v948
      %v950 = vpop.f32.mrf.mxu0
      %v951 = vadd.f32 %v840, %v950
      %952 = vmatmul.bf16.gmra.mxu0 %v819
      %v953 = vpop.f32.mrf.mxu0
      %v954 = vadd.f32 %v840, %v953
      %v955 = vpop.f32.mrf.mxu0
      %v956 = vadd.f32 %v840, %v955
      %957 = vmatmul.bf16.gmra.mxu0 %v820
      %v958 = vpop.f32.mrf.mxu0
      %v959 = vadd.f32 %v840, %v958
      %v960 = vpop.f32.mrf.mxu0
      %v961 = vadd.f32 %v840, %v960
      %962 = vmatmul.bf16.gmra.mxu0 %v821
      %v963 = vpop.f32.mrf.mxu0
      %v964 = vadd.f32 %v840, %v963
      %v965 = vpop.f32.mrf.mxu0
      %v966 = vadd.f32 %v840, %v965
      %967 = vmatmul.bf16.gmra.mxu0 %v822
      %v968 = vpop.f32.mrf.mxu0
      %v969 = vadd.f32 %v840, %v968
      %v970 = vpop.f32.mrf.mxu0
      %v971 = vadd.f32 %v840, %v970
      %972 = vmatmul.bf16.gmra.mxu0 %v823
      %v973 = vpop.f32.mrf.mxu0
      %v974 = vadd.f32 %v840, %v973
      %v975 = vpop.f32.mrf.mxu0
      %v976 = vadd.f32 %v840, %v975
      %977 = vmatmul.bf16.gmra.mxu0 %v824
      %v978 = vpop.f32.mrf.mxu0
      %v979 = vadd.f32 %v840, %v978
      %v980 = vpop.f32.mrf.mxu0
      %v981 = vadd.f32 %v840, %v980
      %982 = vmatmul.bf16.gmra.mxu0 %v825
      %v983 = vpop.f32.mrf.mxu0
      %v984 = vadd.f32 %v840, %v983
      %v985 = vpop.f32.mrf.mxu0
      %v986 = vadd.f32 %v840, %v985
      %987 = vmatmul.bf16.gmra.mxu0 %v826
      %v988 = vpop.f32.mrf.mxu0
      %v989 = vadd.f32 %v840, %v988
      %v990 = vpop.f32.mrf.mxu0
      %v991 = vadd.f32 %v840, %v990
      %992 = vmatmul.bf16.gmra.mxu0 %v827
      %v993 = vpop.f32.mrf.mxu0
      %v994 = vadd.f32 %v840, %v993
      %v995 = vpop.f32.mrf.mxu0
      %v996 = vadd.f32 %v840, %v995
      %997 = vmatmul.bf16.gmra.mxu0 %v828
      %v998 = vpop.f32.mrf.mxu0
      %v999 = vadd.f32 %v840, %v998
      %v1000 = vpop.f32.mrf.mxu0
      %v1001 = vadd.f32 %v840, %v1000
      %1002 = vmatmul.bf16.gmra.mxu0 %v829
      %v1003 = vpop.f32.mrf.mxu0
      %v1004 = vadd.f32 %v840, %v1003
      %v1005 = vpop.f32.mrf.mxu0
      %v1006 = vadd.f32 %v840, %v1005
      %1007 = vmatmul.bf16.gmra.mxu0 %v830
      %v1008 = vpop.f32.mrf.mxu0
      %v1009 = vadd.f32 %v840, %v1008
      %v1010 = vpop.f32.mrf.mxu0
      %v1011 = vadd.f32 %v840, %v1010
      %1012 = vmatmul.bf16.gmra.mxu0 %v831
      %v1013 = vpop.f32.mrf.mxu0
      %v1014 = vadd.f32 %v840, %v1013
      %v1015 = vpop.f32.mrf.mxu0
      %v1016 = vadd.f32 %v840, %v1015
      %1017 = vmatmul.bf16.gmra.mxu0 %v832
      %v1018 = vpop.f32.mrf.mxu0
      %v1019 = vadd.f32 %v840, %v1018
      %v1020 = vpop.f32.mrf.mxu0
      %v1021 = vadd.f32 %v840, %v1020
      %1022 = vmatmul.bf16.gmra.mxu0 %v833
      %v1023 = vpop.f32.mrf.mxu0
      %v1024 = vadd.f32 %v840, %v1023
      %v1025 = vpop.f32.mrf.mxu0
      %v1026 = vadd.f32 %v840, %v1025
      %1027 = vmatmul.bf16.gmra.mxu0 %v834
      %v1028 = vpop.f32.mrf.mxu0
      %v1029 = vadd.f32 %v840, %v1028
      %v1030 = vpop.f32.mrf.mxu0
      %v1031 = vadd.f32 %v840, %v1030
      %1032 = vmatmul.bf16.gmra.mxu0 %v835
      %v1033 = vpop.f32.mrf.mxu0
      %v1034 = vadd.f32 %v840, %v1033
      %v1035 = vpop.f32.mrf.mxu0
      %v1036 = vadd.f32 %v840, %v1035
      %1037 = vmatmul.bf16.gmra.mxu0 %v836
      %v1038 = vpop.f32.mrf.mxu0
      %v1039 = vadd.f32 %v840, %v1038
      %v1040 = vpop.f32.mrf.mxu0
      %v1041 = vadd.f32 %v840, %v1040
      %1042 = vmatmul.bf16.gmra.mxu0 %v837
      %v1043 = vpop.f32.mrf.mxu0
      %v1044 = vadd.f32 %v840, %v1043
      %v1045 = vpop.f32.mrf.mxu0
      %v1046 = vadd.f32 %v840, %v1045
      %1047 = vmatmul.bf16.gmra.mxu0 %v838
      %v1048 = vpop.f32.mrf.mxu0
      %v1049 = vadd.f32 %v840, %v1048
      %v1050 = vpop.f32.mrf.mxu0
      %v1051 = vadd.f32 %v840, %v1050
      %1052 = vmatmul.bf16.gmra.mxu0 %v839
      %v1053 = vpop.f32.mrf.mxu0
      %v1054 = vadd.f32 %v840, %v1053
      %v1055 = vpop.f32.mrf.mxu0
      %v1056 = vadd.f32 %v840, %v1055
      %1057 = vdwg.mxu0
      %v1058 = vmax.f32 %v899, 0.0
      %v1059 = vmax.f32 %v901, 0.0
      %v1060 = vmax.f32 %v904, 0.0
      %v1061 = vmax.f32 %v906, 0.0
      %v1062 = vmax.f32 %v909, 0.0
      %v1063 = vmax.f32 %v911, 0.0
      %v1064 = vmax.f32 %v914, 0.0
      %v1065 = vmax.f32 %v916, 0.0
      %v1066 = vmax.f32 %v919, 0.0
      %v1067 = vmax.f32 %v921, 0.0
      %v1068 = vmax.f32 %v924, 0.0
      %v1069 = vmax.f32 %v926, 0.0
      %v1070 = vmax.f32 %v929, 0.0
      %v1071 = vmax.f32 %v931, 0.0
      %v1072 = vmax.f32 %v934, 0.0
      %v1073 = vmax.f32 %v936, 0.0
      %v1074 = vmax.f32 %v939, 0.0
      %v1075 = vmax.f32 %v941, 0.0
      %v1076 = vmax.f32 %v944, 0.0
      %v1077 = vmax.f32 %v946, 0.0
      %v1078 = vmax.f32 %v949, 0.0
      %v1079 = vmax.f32 %v951, 0.0
      %v1080 = vmax.f32 %v954, 0.0
      %v1081 = vmax.f32 %v956, 0.0
      %v1082 = vmax.f32 %v959, 0.0
      %v1083 = vmax.f32 %v961, 0.0
      %v1084 = vmax.f32 %v964, 0.0
      %v1085 = vmax.f32 %v966, 0.0
      %v1086 = vmax.f32 %v969, 0.0
      %v1087 = vmax.f32 %v971, 0.0
      %v1088 = vmax.f32 %v974, 0.0
      %v1089 = vmax.f32 %v976, 0.0
      %v1090 = vmax.f32 %v979, 0.0
      %v1091 = vmax.f32 %v981, 0.0
      %v1092 = vmax.f32 %v984, 0.0
      %v1093 = vmax.f32 %v986, 0.0
      %v1094 = vmax.f32 %v989, 0.0
      %v1095 = vmax.f32 %v991, 0.0
      %v1096 = vmax.f32 %v994, 0.0
      %v1097 = vmax.f32 %v996, 0.0
      %v1098 = vmax.f32 %v999, 0.0
      %v1099 = vmax.f32 %v1001, 0.0
      %v1100 = vmax.f32 %v1004, 0.0
      %v1101 = vmax.f32 %v1006, 0.0
      %v1102 = vmax.f32 %v1009, 0.0
      %v1103 = vmax.f32 %v1011, 0.0
      %v1104 = vmax.f32 %v1014, 0.0
      %v1105 = vmax.f32 %v1016, 0.0
      %v1106 = vmax.f32 %v1019, 0.0
      %v1107 = vmax.f32 %v1021, 0.0
      %v1108 = vmax.f32 %v1024, 0.0
      %v1109 = vmax.f32 %v1026, 0.0
      %v1110 = vmax.f32 %v1029, 0.0
      %v1111 = vmax.f32 %v1031, 0.0
      %v1112 = vmax.f32 %v1034, 0.0
      %v1113 = vmax.f32 %v1036, 0.0
      %v1114 = vmax.f32 %v1039, 0.0
      %v1115 = vmax.f32 %v1041, 0.0
      %v1116 = vmax.f32 %v1044, 0.0
      %v1117 = vmax.f32 %v1046, 0.0
      %v1118 = vmax.f32 %v1049, 0.0
      %v1119 = vmax.f32 %v1051, 0.0
      %v1120 = vmax.f32 %v1054, 0.0
      %v1121 = vmax.f32 %v1056, 0.0
      %v1122 = vpack.c.bf16 %v1059, %v1058
      %v1123 = vpack.c.bf16 %v1061, %v1060
      %v1124 = vpack.c.bf16 %v1063, %v1062
      %v1125 = vpack.c.bf16 %v1065, %v1064
      %v1126 = vpack.c.bf16 %v1067, %v1066
      %v1127 = vpack.c.bf16 %v1069, %v1068
      %v1128 = vpack.c.bf16 %v1071, %v1070
      %v1129 = vpack.c.bf16 %v1073, %v1072
      %v1130 = vpack.c.bf16 %v1075, %v1074
      %v1131 = vpack.c.bf16 %v1077, %v1076
      %v1132 = vpack.c.bf16 %v1079, %v1078
      %v1133 = vpack.c.bf16 %v1081, %v1080
      %v1134 = vpack.c.bf16 %v1083, %v1082
      %v1135 = vpack.c.bf16 %v1085, %v1084
      %v1136 = vpack.c.bf16 %v1087, %v1086
      %v1137 = vpack.c.bf16 %v1089, %v1088
      %v1138 = vpack.c.bf16 %v1091, %v1090
      %v1139 = vpack.c.bf16 %v1093, %v1092
      %v1140 = vpack.c.bf16 %v1095, %v1094
      %v1141 = vpack.c.bf16 %v1097, %v1096
      %v1142 = vpack.c.bf16 %v1099, %v1098
      %v1143 = vpack.c.bf16 %v1101, %v1100
      %v1144 = vpack.c.bf16 %v1103, %v1102
      %v1145 = vpack.c.bf16 %v1105, %v1104
      %v1146 = vpack.c.bf16 %v1107, %v1106
      %v1147 = vpack.c.bf16 %v1109, %v1108
      %v1148 = vpack.c.bf16 %v1111, %v1110
      %v1149 = vpack.c.bf16 %v1113, %v1112
      %v1150 = vpack.c.bf16 %v1115, %v1114
      %v1151 = vpack.c.bf16 %v1117, %v1116
      %v1152 = vpack.c.bf16 %v1119, %v1118
      %v1153 = vpack.c.bf16 %v1121, %v1120
      %vm1154 = vcmask 31744
      %v1156 = vsel %vm1154, %v384, 0
      %v1159 = vsel %vm1154, %v385, 0
      %v1162 = vsel %vm1154, %v386, 0
      %v1165 = vsel %vm1154, %v387, 0
      %v1168 = vsel %vm1154, %v388, 0
      %v1171 = vsel %vm1154, %v389, 0
      %v1174 = vsel %vm1154, %v390, 0
      %v1177 = vsel %vm1154, %v391, 0
      %v1180 = vsel %vm1154, %v392, 0
      %v1183 = vsel %vm1154, %v393, 0
      %v1186 = vsel %vm1154, %v394, 0
      %v1189 = vsel %vm1154, %v395, 0
      %v1192 = vsel %vm1154, %v396, 0
      %v1195 = vsel %vm1154, %v397, 0
      %v1198 = vsel %vm1154, %v398, 0
      %v1201 = vsel %vm1154, %v399, 0
      %v1204 = vsel %vm1154, %v400, 0
      %v1207 = vsel %vm1154, %v401, 0
      %v1210 = vsel %vm1154, %v402, 0
      %v1213 = vsel %vm1154, %v403, 0
      %v1216 = vsel %vm1154, %v404, 0
      %v1219 = vsel %vm1154, %v405, 0
      %v1222 = vsel %vm1154, %v406, 0
      %v1225 = vsel %vm1154, %v407, 0
      %v1228 = vsel %vm1154, %v408, 0
      %v1231 = vsel %vm1154, %v409, 0
      %v1234 = vsel %vm1154, %v410, 0
      %v1237 = vsel %vm1154, %v411, 0
      %v1240 = vsel %vm1154, %v412, 0
      %v1243 = vsel %vm1154, %v413, 0
      %v1246 = vsel %vm1154, %v414, 0
      %v1249 = vsel %vm1154, %v415, 0
      %vm1251 = vcmask 1041408
      %v1253 = vsel %vm1251, %v450, 0
      %1255 = vmatpush.bf16.msra.mxu0 0
      %1256 = vmatpush.bf16.msra.mxu0 0
      %1257 = vmatpush.bf16.msra.mxu0 0
      %1258 = vmatpush.bf16.msra.mxu0 0
      %1259 = vmatpush.bf16.msra.mxu0 0
      %1260 = vmatpush.bf16.msra.mxu0 0
      %1261 = vmatpush.bf16.msra.mxu0 0
      %1262 = vmatpush.bf16.msra.mxu0 %v1253
      %1263 = vmatmul.bf16.gmra.mxu0 %v1156
      %v1264 = vpop.f32.mrf.mxu0
      %v1265 = vadd.f32 0.0, %v1264
      %v1266 = vpop.f32.mrf.mxu0
      %v1267 = vadd.f32 0.0, %v1266
      %1268 = vmatmul.bf16.gmra.mxu0 %v1159
      %v1269 = vpop.f32.mrf.mxu0
      %v1270 = vadd.f32 0.0, %v1269
      %v1271 = vpop.f32.mrf.mxu0
      %v1272 = vadd.f32 0.0, %v1271
      %1273 = vmatmul.bf16.gmra.mxu0 %v1162
      %v1274 = vpop.f32.mrf.mxu0
      %v1275 = vadd.f32 0.0, %v1274
      %v1276 = vpop.f32.mrf.mxu0
      %v1277 = vadd.f32 0.0, %v1276
      %1278 = vmatmul.bf16.gmra.mxu0 %v1165
      %v1279 = vpop.f32.mrf.mxu0
      %v1280 = vadd.f32 0.0, %v1279
      %v1281 = vpop.f32.mrf.mxu0
      %v1282 = vadd.f32 0.0, %v1281
      %1283 = vmatmul.bf16.gmra.mxu0 %v1168
      %v1284 = vpop.f32.mrf.mxu0
      %v1285 = vadd.f32 0.0, %v1284
      %v1286 = vpop.f32.mrf.mxu0
      %v1287 = vadd.f32 0.0, %v1286
      %1288 = vmatmul.bf16.gmra.mxu0 %v1171
      %v1289 = vpop.f32.mrf.mxu0
      %v1290 = vadd.f32 0.0, %v1289
      %v1291 = vpop.f32.mrf.mxu0
      %v1292 = vadd.f32 0.0, %v1291
      %1293 = vmatmul.bf16.gmra.mxu0 %v1174
      %v1294 = vpop.f32.mrf.mxu0
      %v1295 = vadd.f32 0.0, %v1294
      %v1296 = vpop.f32.mrf.mxu0
      %v1297 = vadd.f32 0.0, %v1296
      %1298 = vmatmul.bf16.gmra.mxu0 %v1177
      %v1299 = vpop.f32.mrf.mxu0
      %v1300 = vadd.f32 0.0, %v1299
      %v1301 = vpop.f32.mrf.mxu0
      %v1302 = vadd.f32 0.0, %v1301
      %1303 = vmatmul.bf16.gmra.mxu0 %v1180
      %v1304 = vpop.f32.mrf.mxu0
      %v1305 = vadd.f32 0.0, %v1304
      %v1306 = vpop.f32.mrf.mxu0
      %v1307 = vadd.f32 0.0, %v1306
      %1308 = vmatmul.bf16.gmra.mxu0 %v1183
      %v1309 = vpop.f32.mrf.mxu0
      %v1310 = vadd.f32 0.0, %v1309
      %v1311 = vpop.f32.mrf.mxu0
      %v1312 = vadd.f32 0.0, %v1311
      %1313 = vmatmul.bf16.gmra.mxu0 %v1186
      %v1314 = vpop.f32.mrf.mxu0
      %v1315 = vadd.f32 0.0, %v1314
      %v1316 = vpop.f32.mrf.mxu0
      %v1317 = vadd.f32 0.0, %v1316
      %1318 = vmatmul.bf16.gmra.mxu0 %v1189
      %v1319 = vpop.f32.mrf.mxu0
      %v1320 = vadd.f32 0.0, %v1319
      %v1321 = vpop.f32.mrf.mxu0
      %v1322 = vadd.f32 0.0, %v1321
      %1323 = vmatmul.bf16.gmra.mxu0 %v1192
      %v1324 = vpop.f32.mrf.mxu0
      %v1325 = vadd.f32 0.0, %v1324
      %v1326 = vpop.f32.mrf.mxu0
      %v1327 = vadd.f32 0.0, %v1326
      %1328 = vmatmul.bf16.gmra.mxu0 %v1195
      %v1329 = vpop.f32.mrf.mxu0
      %v1330 = vadd.f32 0.0, %v1329
      %v1331 = vpop.f32.mrf.mxu0
      %v1332 = vadd.f32 0.0, %v1331
      %1333 = vmatmul.bf16.gmra.mxu0 %v1198
      %v1334 = vpop.f32.mrf.mxu0
      %v1335 = vadd.f32 0.0, %v1334
      %v1336 = vpop.f32.mrf.mxu0
      %v1337 = vadd.f32 0.0, %v1336
      %1338 = vmatmul.bf16.gmra.mxu0 %v1201
      %v1339 = vpop.f32.mrf.mxu0
      %v1340 = vadd.f32 0.0, %v1339
      %v1341 = vpop.f32.mrf.mxu0
      %v1342 = vadd.f32 0.0, %v1341
      %1343 = vmatmul.bf16.gmra.mxu0 %v1204
      %v1344 = vpop.f32.mrf.mxu0
      %v1345 = vadd.f32 0.0, %v1344
      %v1346 = vpop.f32.mrf.mxu0
      %v1347 = vadd.f32 0.0, %v1346
      %1348 = vmatmul.bf16.gmra.mxu0 %v1207
      %v1349 = vpop.f32.mrf.mxu0
      %v1350 = vadd.f32 0.0, %v1349
      %v1351 = vpop.f32.mrf.mxu0
      %v1352 = vadd.f32 0.0, %v1351
      %1353 = vmatmul.bf16.gmra.mxu0 %v1210
      %v1354 = vpop.f32.mrf.mxu0
      %v1355 = vadd.f32 0.0, %v1354
      %v1356 = vpop.f32.mrf.mxu0
      %v1357 = vadd.f32 0.0, %v1356
      %1358 = vmatmul.bf16.gmra.mxu0 %v1213
      %v1359 = vpop.f32.mrf.mxu0
      %v1360 = vadd.f32 0.0, %v1359
      %v1361 = vpop.f32.mrf.mxu0
      %v1362 = vadd.f32 0.0, %v1361
      %1363 = vmatmul.bf16.gmra.mxu0 %v1216
      %v1364 = vpop.f32.mrf.mxu0
      %v1365 = vadd.f32 0.0, %v1364
      %v1366 = vpop.f32.mrf.mxu0
      %v1367 = vadd.f32 0.0, %v1366
      %1368 = vmatmul.bf16.gmra.mxu0 %v1219
      %v1369 = vpop.f32.mrf.mxu0
      %v1370 = vadd.f32 0.0, %v1369
      %v1371 = vpop.f32.mrf.mxu0
      %v1372 = vadd.f32 0.0, %v1371
      %1373 = vmatmul.bf16.gmra.mxu0 %v1222
      %v1374 = vpop.f32.mrf.mxu0
      %v1375 = vadd.f32 0.0, %v1374
      %v1376 = vpop.f32.mrf.mxu0
      %v1377 = vadd.f32 0.0, %v1376
      %1378 = vmatmul.bf16.gmra.mxu0 %v1225
      %v1379 = vpop.f32.mrf.mxu0
      %v1380 = vadd.f32 0.0, %v1379
      %v1381 = vpop.f32.mrf.mxu0
      %v1382 = vadd.f32 0.0, %v1381
      %1383 = vmatmul.bf16.gmra.mxu0 %v1228
      %v1384 = vpop.f32.mrf.mxu0
      %v1385 = vadd.f32 0.0, %v1384
      %v1386 = vpop.f32.mrf.mxu0
      %v1387 = vadd.f32 0.0, %v1386
      %1388 = vmatmul.bf16.gmra.mxu0 %v1231
      %v1389 = vpop.f32.mrf.mxu0
      %v1390 = vadd.f32 0.0, %v1389
      %v1391 = vpop.f32.mrf.mxu0
      %v1392 = vadd.f32 0.0, %v1391
      %1393 = vmatmul.bf16.gmra.mxu0 %v1234
      %v1394 = vpop.f32.mrf.mxu0
      %v1395 = vadd.f32 0.0, %v1394
      %v1396 = vpop.f32.mrf.mxu0
      %v1397 = vadd.f32 0.0, %v1396
      %1398 = vmatmul.bf16.gmra.mxu0 %v1237
      %v1399 = vpop.f32.mrf.mxu0
      %v1400 = vadd.f32 0.0, %v1399
      %v1401 = vpop.f32.mrf.mxu0
      %v1402 = vadd.f32 0.0, %v1401
      %1403 = vmatmul.bf16.gmra.mxu0 %v1240
      %v1404 = vpop.f32.mrf.mxu0
      %v1405 = vadd.f32 0.0, %v1404
      %v1406 = vpop.f32.mrf.mxu0
      %v1407 = vadd.f32 0.0, %v1406
      %1408 = vmatmul.bf16.gmra.mxu0 %v1243
      %v1409 = vpop.f32.mrf.mxu0
      %v1410 = vadd.f32 0.0, %v1409
      %v1411 = vpop.f32.mrf.mxu0
      %v1412 = vadd.f32 0.0, %v1411
      %1413 = vmatmul.bf16.gmra.mxu0 %v1246
      %v1414 = vpop.f32.mrf.mxu0
      %v1415 = vadd.f32 0.0, %v1414
      %v1416 = vpop.f32.mrf.mxu0
      %v1417 = vadd.f32 0.0, %v1416
      %1418 = vmatmul.bf16.gmra.mxu0 %v1249
      %v1419 = vpop.f32.mrf.mxu0
      %v1420 = vadd.f32 0.0, %v1419
      %v1421 = vpop.f32.mrf.mxu0
      %v1422 = vadd.f32 0.0, %v1421
      %1423 = vdwg.mxu0
      %v1440 = vunpack.c.l.b16 %v434
      %v1441 = vunpack.c.l.b16 %v435
      %v1442 = vunpack.c.l.b16 %v436
      %v1443 = vunpack.c.l.b16 %v437
      %v1444 = vunpack.c.l.b16 %v438
      %v1445 = vunpack.c.l.b16 %v439
      %v1446 = vunpack.c.l.b16 %v440
      %v1447 = vunpack.c.l.b16 %v441
      %v1448 = vunpack.c.l.b16 %v442
      %v1449 = vunpack.c.l.b16 %v443
      %v1450 = vunpack.c.l.b16 %v444
      %v1451 = vunpack.c.l.b16 %v445
      %v1452 = vunpack.c.l.b16 %v446
      %v1453 = vunpack.c.l.b16 %v447
      %v1454 = vunpack.c.l.b16 %v448
      %v1455 = vunpack.c.l.b16 %v449
      %v1456 = vpack.c.b16 %v1441, %v1440
      %v1457 = vpack.c.b16 %v1443, %v1442
      %v1458 = vpack.c.b16 %v1445, %v1444
      %v1459 = vpack.c.b16 %v1447, %v1446
      %v1460 = vpack.c.b16 %v1449, %v1448
      %v1461 = vpack.c.b16 %v1451, %v1450
      %v1462 = vpack.c.b16 %v1453, %v1452
      %v1463 = vpack.c.b16 %v1455, %v1454
      %1472 = vmatpush.bf16.msra.mxu0 %v1463
      %1473 = vmatpush.bf16.msra.mxu0 %v1462
      %1474 = vmatpush.bf16.msra.mxu0 %v1461
      %1475 = vmatpush.bf16.msra.mxu0 %v1460
      %1476 = vmatpush.bf16.msra.mxu0 %v1459
      %1477 = vmatpush.bf16.msra.mxu0 %v1458
      %1478 = vmatpush.bf16.msra.mxu0 %v1457
      %1479 = vmatpush.bf16.msra.mxu0 %v1456
      %1480 = vmatmul.bf16.gmra.mxu0 %v1122
      %v1481 = vpop.f32.mrf.mxu0
      %v1482 = vadd.f32 %v1265, %v1481
      %v1483 = vpop.f32.mrf.mxu0
      %v1484 = vadd.f32 %v1267, %v1483
      %1485 = vmatmul.bf16.gmra.mxu0 %v1123
      %v1486 = vpop.f32.mrf.mxu0
      %v1487 = vadd.f32 %v1270, %v1486
      %v1488 = vpop.f32.mrf.mxu0
      %v1489 = vadd.f32 %v1272, %v1488
      %1490 = vmatmul.bf16.gmra.mxu0 %v1124
      %v1491 = vpop.f32.mrf.mxu0
      %v1492 = vadd.f32 %v1275, %v1491
      %v1493 = vpop.f32.mrf.mxu0
      %v1494 = vadd.f32 %v1277, %v1493
      %1495 = vmatmul.bf16.gmra.mxu0 %v1125
      %v1496 = vpop.f32.mrf.mxu0
      %v1497 = vadd.f32 %v1280, %v1496
      %v1498 = vpop.f32.mrf.mxu0
      %v1499 = vadd.f32 %v1282, %v1498
      %1500 = vmatmul.bf16.gmra.mxu0 %v1126
      %v1501 = vpop.f32.mrf.mxu0
      %v1502 = vadd.f32 %v1285, %v1501
      %v1503 = vpop.f32.mrf.mxu0
      %v1504 = vadd.f32 %v1287, %v1503
      %1505 = vmatmul.bf16.gmra.mxu0 %v1127
      %v1506 = vpop.f32.mrf.mxu0
      %v1507 = vadd.f32 %v1290, %v1506
      %v1508 = vpop.f32.mrf.mxu0
      %v1509 = vadd.f32 %v1292, %v1508
      %1510 = vmatmul.bf16.gmra.mxu0 %v1128
      %v1511 = vpop.f32.mrf.mxu0
      %v1512 = vadd.f32 %v1295, %v1511
      %v1513 = vpop.f32.mrf.mxu0
      %v1514 = vadd.f32 %v1297, %v1513
      %1515 = vmatmul.bf16.gmra.mxu0 %v1129
      %v1516 = vpop.f32.mrf.mxu0
      %v1517 = vadd.f32 %v1300, %v1516
      %v1518 = vpop.f32.mrf.mxu0
      %v1519 = vadd.f32 %v1302, %v1518
      %1520 = vmatmul.bf16.gmra.mxu0 %v1130
      %v1521 = vpop.f32.mrf.mxu0
      %v1522 = vadd.f32 %v1305, %v1521
      %v1523 = vpop.f32.mrf.mxu0
      %v1524 = vadd.f32 %v1307, %v1523
      %1525 = vmatmul.bf16.gmra.mxu0 %v1131
      %v1526 = vpop.f32.mrf.mxu0
      %v1527 = vadd.f32 %v1310, %v1526
      %v1528 = vpop.f32.mrf.mxu0
      %v1529 = vadd.f32 %v1312, %v1528
      %1530 = vmatmul.bf16.gmra.mxu0 %v1132
      %v1531 = vpop.f32.mrf.mxu0
      %v1532 = vadd.f32 %v1315, %v1531
      %v1533 = vpop.f32.mrf.mxu0
      %v1534 = vadd.f32 %v1317, %v1533
      %1535 = vmatmul.bf16.gmra.mxu0 %v1133
      %v1536 = vpop.f32.mrf.mxu0
      %v1537 = vadd.f32 %v1320, %v1536
      %v1538 = vpop.f32.mrf.mxu0
      %v1539 = vadd.f32 %v1322, %v1538
      %1540 = vmatmul.bf16.gmra.mxu0 %v1134
      %v1541 = vpop.f32.mrf.mxu0
      %v1542 = vadd.f32 %v1325, %v1541
      %v1543 = vpop.f32.mrf.mxu0
      %v1544 = vadd.f32 %v1327, %v1543
      %1545 = vmatmul.bf16.gmra.mxu0 %v1135
      %v1546 = vpop.f32.mrf.mxu0
      %v1547 = vadd.f32 %v1330, %v1546
      %v1548 = vpop.f32.mrf.mxu0
      %v1549 = vadd.f32 %v1332, %v1548
      %1550 = vmatmul.bf16.gmra.mxu0 %v1136
      %v1551 = vpop.f32.mrf.mxu0
      %v1552 = vadd.f32 %v1335, %v1551
      %v1553 = vpop.f32.mrf.mxu0
      %v1554 = vadd.f32 %v1337, %v1553
      %1555 = vmatmul.bf16.gmra.mxu0 %v1137
      %v1556 = vpop.f32.mrf.mxu0
      %v1557 = vadd.f32 %v1340, %v1556
      %v1558 = vpop.f32.mrf.mxu0
      %v1559 = vadd.f32 %v1342, %v1558
      %1560 = vmatmul.bf16.gmra.mxu0 %v1138
      %v1561 = vpop.f32.mrf.mxu0
      %v1562 = vadd.f32 %v1345, %v1561
      %v1563 = vpop.f32.mrf.mxu0
      %v1564 = vadd.f32 %v1347, %v1563
      %1565 = vmatmul.bf16.gmra.mxu0 %v1139
      %v1566 = vpop.f32.mrf.mxu0
      %v1567 = vadd.f32 %v1350, %v1566
      %v1568 = vpop.f32.mrf.mxu0
      %v1569 = vadd.f32 %v1352, %v1568
      %1570 = vmatmul.bf16.gmra.mxu0 %v1140
      %v1571 = vpop.f32.mrf.mxu0
      %v1572 = vadd.f32 %v1355, %v1571
      %v1573 = vpop.f32.mrf.mxu0
      %v1574 = vadd.f32 %v1357, %v1573
      %1575 = vmatmul.bf16.gmra.mxu0 %v1141
      %v1576 = vpop.f32.mrf.mxu0
      %v1577 = vadd.f32 %v1360, %v1576
      %v1578 = vpop.f32.mrf.mxu0
      %v1579 = vadd.f32 %v1362, %v1578
      %1580 = vmatmul.bf16.gmra.mxu0 %v1142
      %v1581 = vpop.f32.mrf.mxu0
      %v1582 = vadd.f32 %v1365, %v1581
      %v1583 = vpop.f32.mrf.mxu0
      %v1584 = vadd.f32 %v1367, %v1583
      %1585 = vmatmul.bf16.gmra.mxu0 %v1143
      %v1586 = vpop.f32.mrf.mxu0
      %v1587 = vadd.f32 %v1370, %v1586
      %v1588 = vpop.f32.mrf.mxu0
      %v1589 = vadd.f32 %v1372, %v1588
      %1590 = vmatmul.bf16.gmra.mxu0 %v1144
      %v1591 = vpop.f32.mrf.mxu0
      %v1592 = vadd.f32 %v1375, %v1591
      %v1593 = vpop.f32.mrf.mxu0
      %v1594 = vadd.f32 %v1377, %v1593
      %1595 = vmatmul.bf16.gmra.mxu0 %v1145
      %v1596 = vpop.f32.mrf.mxu0
      %v1597 = vadd.f32 %v1380, %v1596
      %v1598 = vpop.f32.mrf.mxu0
      %v1599 = vadd.f32 %v1382, %v1598
      %1600 = vmatmul.bf16.gmra.mxu0 %v1146
      %v1601 = vpop.f32.mrf.mxu0
      %v1602 = vadd.f32 %v1385, %v1601
      %v1603 = vpop.f32.mrf.mxu0
      %v1604 = vadd.f32 %v1387, %v1603
      %1605 = vmatmul.bf16.gmra.mxu0 %v1147
      %v1606 = vpop.f32.mrf.mxu0
      %v1607 = vadd.f32 %v1390, %v1606
      %v1608 = vpop.f32.mrf.mxu0
      %v1609 = vadd.f32 %v1392, %v1608
      %1610 = vmatmul.bf16.gmra.mxu0 %v1148
      %v1611 = vpop.f32.mrf.mxu0
      %v1612 = vadd.f32 %v1395, %v1611
      %v1613 = vpop.f32.mrf.mxu0
      %v1614 = vadd.f32 %v1397, %v1613
      %1615 = vmatmul.bf16.gmra.mxu0 %v1149
      %v1616 = vpop.f32.mrf.mxu0
      %v1617 = vadd.f32 %v1400, %v1616
      %v1618 = vpop.f32.mrf.mxu0
      %v1619 = vadd.f32 %v1402, %v1618
      %1620 = vmatmul.bf16.gmra.mxu0 %v1150
      %v1621 = vpop.f32.mrf.mxu0
      %v1622 = vadd.f32 %v1405, %v1621
      %v1623 = vpop.f32.mrf.mxu0
      %v1624 = vadd.f32 %v1407, %v1623
      %1625 = vmatmul.bf16.gmra.mxu0 %v1151
      %v1626 = vpop.f32.mrf.mxu0
      %v1627 = vadd.f32 %v1410, %v1626
      %v1628 = vpop.f32.mrf.mxu0
      %v1629 = vadd.f32 %v1412, %v1628
      %1630 = vmatmul.bf16.gmra.mxu0 %v1152
      %v1631 = vpop.f32.mrf.mxu0
      %v1632 = vadd.f32 %v1415, %v1631
      %v1633 = vpop.f32.mrf.mxu0
      %v1634 = vadd.f32 %v1417, %v1633
      %1635 = vmatmul.bf16.gmra.mxu0 %v1153
      %v1636 = vpop.f32.mrf.mxu0
      %v1637 = vadd.f32 %v1420, %v1636
      %v1638 = vpop.f32.mrf.mxu0
      %v1639 = vadd.f32 %v1422, %v1638
      %1640 = vdwg.mxu0
      %v1641 = vperm.slane %v469, 0
      %v1642 = vadd.f32 %v1482, %v1641
      %v1643 = vadd.f32 %v1484, %v1641
      %v1644 = vadd.f32 %v1487, %v1641
      %v1645 = vadd.f32 %v1489, %v1641
      %v1646 = vadd.f32 %v1492, %v1641
      %v1647 = vadd.f32 %v1494, %v1641
      %v1648 = vadd.f32 %v1497, %v1641
      %v1649 = vadd.f32 %v1499, %v1641
      %v1650 = vadd.f32 %v1502, %v1641
      %v1651 = vadd.f32 %v1504, %v1641
      %v1652 = vadd.f32 %v1507, %v1641
      %v1653 = vadd.f32 %v1509, %v1641
      %v1654 = vadd.f32 %v1512, %v1641
      %v1655 = vadd.f32 %v1514, %v1641
      %v1656 = vadd.f32 %v1517, %v1641
      %v1657 = vadd.f32 %v1519, %v1641
      %v1658 = vadd.f32 %v1522, %v1641
      %v1659 = vadd.f32 %v1524, %v1641
      %v1660 = vadd.f32 %v1527, %v1641
      %v1661 = vadd.f32 %v1529, %v1641
      %v1662 = vadd.f32 %v1532, %v1641
      %v1663 = vadd.f32 %v1534, %v1641
      %v1664 = vadd.f32 %v1537, %v1641
      %v1665 = vadd.f32 %v1539, %v1641
      %v1666 = vadd.f32 %v1542, %v1641
      %v1667 = vadd.f32 %v1544, %v1641
      %v1668 = vadd.f32 %v1547, %v1641
      %v1669 = vadd.f32 %v1549, %v1641
      %v1670 = vadd.f32 %v1552, %v1641
      %v1671 = vadd.f32 %v1554, %v1641
      %v1672 = vadd.f32 %v1557, %v1641
      %v1673 = vadd.f32 %v1559, %v1641
      %v1674 = vadd.f32 %v1562, %v1641
      %v1675 = vadd.f32 %v1564, %v1641
      %v1676 = vadd.f32 %v1567, %v1641
      %v1677 = vadd.f32 %v1569, %v1641
      %v1678 = vadd.f32 %v1572, %v1641
      %v1679 = vadd.f32 %v1574, %v1641
      %v1680 = vadd.f32 %v1577, %v1641
      %v1681 = vadd.f32 %v1579, %v1641
      %v1682 = vadd.f32 %v1582, %v1641
      %v1683 = vadd.f32 %v1584, %v1641
      %v1684 = vadd.f32 %v1587, %v1641
      %v1685 = vadd.f32 %v1589, %v1641
      %v1686 = vadd.f32 %v1592, %v1641
      %v1687 = vadd.f32 %v1594, %v1641
      %v1688 = vadd.f32 %v1597, %v1641
      %v1689 = vadd.f32 %v1599, %v1641
      %v1690 = vadd.f32 %v1602, %v1641
      %v1691 = vadd.f32 %v1604, %v1641
      %v1692 = vadd.f32 %v1607, %v1641
      %v1693 = vadd.f32 %v1609, %v1641
      %v1694 = vadd.f32 %v1612, %v1641
      %v1695 = vadd.f32 %v1614, %v1641
      %v1696 = vadd.f32 %v1617, %v1641
      %v1697 = vadd.f32 %v1619, %v1641
      %v1698 = vadd.f32 %v1622, %v1641
      %v1699 = vadd.f32 %v1624, %v1641
      %v1700 = vadd.f32 %v1627, %v1641
      %v1701 = vadd.f32 %v1629, %v1641
      %v1702 = vadd.f32 %v1632, %v1641
      %v1703 = vadd.f32 %v1634, %v1641
      %v1704 = vadd.f32 %v1637, %v1641
      %v1705 = vadd.f32 %v1639, %v1641
      %v1706 = vmax.f32 %v1642, 0.0
      %v1707 = vmax.f32 %v1643, 0.0
      %v1708 = vmax.f32 %v1644, 0.0
      %v1709 = vmax.f32 %v1645, 0.0
      %v1710 = vmax.f32 %v1646, 0.0
      %v1711 = vmax.f32 %v1647, 0.0
      %v1712 = vmax.f32 %v1648, 0.0
      %v1713 = vmax.f32 %v1649, 0.0
      %v1714 = vmax.f32 %v1650, 0.0
      %v1715 = vmax.f32 %v1651, 0.0
      %v1716 = vmax.f32 %v1652, 0.0
      %v1717 = vmax.f32 %v1653, 0.0
      %v1718 = vmax.f32 %v1654, 0.0
      %v1719 = vmax.f32 %v1655, 0.0
      %v1720 = vmax.f32 %v1656, 0.0
      %v1721 = vmax.f32 %v1657, 0.0
      %v1722 = vmax.f32 %v1658, 0.0
      %v1723 = vmax.f32 %v1659, 0.0
      %v1724 = vmax.f32 %v1660, 0.0
      %v1725 = vmax.f32 %v1661, 0.0
      %v1726 = vmax.f32 %v1662, 0.0
      %v1727 = vmax.f32 %v1663, 0.0
      %v1728 = vmax.f32 %v1664, 0.0
      %v1729 = vmax.f32 %v1665, 0.0
      %v1730 = vmax.f32 %v1666, 0.0
      %v1731 = vmax.f32 %v1667, 0.0
      %v1732 = vmax.f32 %v1668, 0.0
      %v1733 = vmax.f32 %v1669, 0.0
      %v1734 = vmax.f32 %v1670, 0.0
      %v1735 = vmax.f32 %v1671, 0.0
      %v1736 = vmax.f32 %v1672, 0.0
      %v1737 = vmax.f32 %v1673, 0.0
      %v1738 = vmax.f32 %v1674, 0.0
      %v1739 = vmax.f32 %v1675, 0.0
      %v1740 = vmax.f32 %v1676, 0.0
      %v1741 = vmax.f32 %v1677, 0.0
      %v1742 = vmax.f32 %v1678, 0.0
      %v1743 = vmax.f32 %v1679, 0.0
      %v1744 = vmax.f32 %v1680, 0.0
      %v1745 = vmax.f32 %v1681, 0.0
      %v1746 = vmax.f32 %v1682, 0.0
      %v1747 = vmax.f32 %v1683, 0.0
      %v1748 = vmax.f32 %v1684, 0.0
      %v1749 = vmax.f32 %v1685, 0.0
      %v1750 = vmax.f32 %v1686, 0.0
      %v1751 = vmax.f32 %v1687, 0.0
      %v1752 = vmax.f32 %v1688, 0.0
      %v1753 = vmax.f32 %v1689, 0.0
      %v1754 = vmax.f32 %v1690, 0.0
      %v1755 = vmax.f32 %v1691, 0.0
      %v1756 = vmax.f32 %v1692, 0.0
      %v1757 = vmax.f32 %v1693, 0.0
      %v1758 = vmax.f32 %v1694, 0.0
      %v1759 = vmax.f32 %v1695, 0.0
      %v1760 = vmax.f32 %v1696, 0.0
      %v1761 = vmax.f32 %v1697, 0.0
      %v1762 = vmax.f32 %v1698, 0.0
      %v1763 = vmax.f32 %v1699, 0.0
      %v1764 = vmax.f32 %v1700, 0.0
      %v1765 = vmax.f32 %v1701, 0.0
      %v1766 = vmax.f32 %v1702, 0.0
      %v1767 = vmax.f32 %v1703, 0.0
      %v1768 = vmax.f32 %v1704, 0.0
      %v1769 = vmax.f32 %v1705, 0.0
      %v1770 = vpack.c.bf16 %v1707, %v1706
      %v1771 = vpack.c.bf16 %v1709, %v1708
      %v1772 = vpack.c.bf16 %v1711, %v1710
      %v1773 = vpack.c.bf16 %v1713, %v1712
      %v1774 = vpack.c.bf16 %v1715, %v1714
      %v1775 = vpack.c.bf16 %v1717, %v1716
      %v1776 = vpack.c.bf16 %v1719, %v1718
      %v1777 = vpack.c.bf16 %v1721, %v1720
      %v1778 = vpack.c.bf16 %v1723, %v1722
      %v1779 = vpack.c.bf16 %v1725, %v1724
      %v1780 = vpack.c.bf16 %v1727, %v1726
      %v1781 = vpack.c.bf16 %v1729, %v1728
      %v1782 = vpack.c.bf16 %v1731, %v1730
      %v1783 = vpack.c.bf16 %v1733, %v1732
      %v1784 = vpack.c.bf16 %v1735, %v1734
      %v1785 = vpack.c.bf16 %v1737, %v1736
      %v1786 = vpack.c.bf16 %v1739, %v1738
      %v1787 = vpack.c.bf16 %v1741, %v1740
      %v1788 = vpack.c.bf16 %v1743, %v1742
      %v1789 = vpack.c.bf16 %v1745, %v1744
      %v1790 = vpack.c.bf16 %v1747, %v1746
      %v1791 = vpack.c.bf16 %v1749, %v1748
      %v1792 = vpack.c.bf16 %v1751, %v1750
      %v1793 = vpack.c.bf16 %v1753, %v1752
      %v1794 = vpack.c.bf16 %v1755, %v1754
      %v1795 = vpack.c.bf16 %v1757, %v1756
      %v1796 = vpack.c.bf16 %v1759, %v1758
      %v1797 = vpack.c.bf16 %v1761, %v1760
      %v1798 = vpack.c.bf16 %v1763, %v1762
      %v1799 = vpack.c.bf16 %v1765, %v1764
      %v1800 = vpack.c.bf16 %v1767, %v1766
      %v1801 = vpack.c.bf16 %v1769, %v1768
      %v1802 = vperm.slane %v470, 0
      %v1819 = vunpack.c.l.b16 %v451
      %v1820 = vunpack.c.l.b16 %v452
      %v1821 = vunpack.c.l.b16 %v453
      %v1822 = vunpack.c.l.b16 %v454
      %v1823 = vunpack.c.l.b16 %v455
      %v1824 = vunpack.c.l.b16 %v456
      %v1825 = vunpack.c.l.b16 %v457
      %v1826 = vunpack.c.l.b16 %v458
      %v1827 = vunpack.c.l.b16 %v459
      %v1828 = vunpack.c.l.b16 %v460
      %v1829 = vunpack.c.l.b16 %v461
      %v1830 = vunpack.c.l.b16 %v462
      %v1831 = vunpack.c.l.b16 %v463
      %v1832 = vunpack.c.l.b16 %v464
      %v1833 = vunpack.c.l.b16 %v465
      %v1834 = vunpack.c.l.b16 %v466
      %v1835 = vpack.c.b16 %v1820, %v1819
      %v1836 = vpack.c.b16 %v1822, %v1821
      %v1837 = vpack.c.b16 %v1824, %v1823
      %v1838 = vpack.c.b16 %v1826, %v1825
      %v1839 = vpack.c.b16 %v1828, %v1827
      %v1840 = vpack.c.b16 %v1830, %v1829
      %v1841 = vpack.c.b16 %v1832, %v1831
      %v1842 = vpack.c.b16 %v1834, %v1833
      %1851 = vmatpush.bf16.msra.mxu0 %v1842
      %1852 = vmatpush.bf16.msra.mxu0 %v1841
      %1853 = vmatpush.bf16.msra.mxu0 %v1840
      %1854 = vmatpush.bf16.msra.mxu0 %v1839
      %1855 = vmatpush.bf16.msra.mxu0 %v1838
      %1856 = vmatpush.bf16.msra.mxu0 %v1837
      %1857 = vmatpush.bf16.msra.mxu0 %v1836
      %1858 = vmatpush.bf16.msra.mxu0 %v1835
      %1859 = vmatmul.bf16.gmra.mxu0 %v1770
      %v1860 = vpop.f32.mrf.mxu0
      %v1861 = vadd.f32 %v1802, %v1860
      %v1862 = vpop.f32.mrf.mxu0
      %v1863 = vadd.f32 %v1802, %v1862
      %1864 = vmatmul.bf16.gmra.mxu0 %v1771
      %v1865 = vpop.f32.mrf.mxu0
      %v1866 = vadd.f32 %v1802, %v1865
      %v1867 = vpop.f32.mrf.mxu0
      %v1868 = vadd.f32 %v1802, %v1867
      %1869 = vmatmul.bf16.gmra.mxu0 %v1772
      %v1870 = vpop.f32.mrf.mxu0
      %v1871 = vadd.f32 %v1802, %v1870
      %v1872 = vpop.f32.mrf.mxu0
      %v1873 = vadd.f32 %v1802, %v1872
      %1874 = vmatmul.bf16.gmra.mxu0 %v1773
      %v1875 = vpop.f32.mrf.mxu0
      %v1876 = vadd.f32 %v1802, %v1875
      %v1877 = vpop.f32.mrf.mxu0
      %v1878 = vadd.f32 %v1802, %v1877
      %1879 = vmatmul.bf16.gmra.mxu0 %v1774
      %v1880 = vpop.f32.mrf.mxu0
      %v1881 = vadd.f32 %v1802, %v1880
      %v1882 = vpop.f32.mrf.mxu0
      %v1883 = vadd.f32 %v1802, %v1882
      %1884 = vmatmul.bf16.gmra.mxu0 %v1775
      %v1885 = vpop.f32.mrf.mxu0
      %v1886 = vadd.f32 %v1802, %v1885
      %v1887 = vpop.f32.mrf.mxu0
      %v1888 = vadd.f32 %v1802, %v1887
      %1889 = vmatmul.bf16.gmra.mxu0 %v1776
      %v1890 = vpop.f32.mrf.mxu0
      %v1891 = vadd.f32 %v1802, %v1890
      %v1892 = vpop.f32.mrf.mxu0
      %v1893 = vadd.f32 %v1802, %v1892
      %1894 = vmatmul.bf16.gmra.mxu0 %v1777
      %v1895 = vpop.f32.mrf.mxu0
      %v1896 = vadd.f32 %v1802, %v1895
      %v1897 = vpop.f32.mrf.mxu0
      %v1898 = vadd.f32 %v1802, %v1897
      %1899 = vmatmul.bf16.gmra.mxu0 %v1778
      %v1900 = vpop.f32.mrf.mxu0
      %v1901 = vadd.f32 %v1802, %v1900
      %v1902 = vpop.f32.mrf.mxu0
      %v1903 = vadd.f32 %v1802, %v1902
      %1904 = vmatmul.bf16.gmra.mxu0 %v1779
      %v1905 = vpop.f32.mrf.mxu0
      %v1906 = vadd.f32 %v1802, %v1905
      %v1907 = vpop.f32.mrf.mxu0
      %v1908 = vadd.f32 %v1802, %v1907
      %1909 = vmatmul.bf16.gmra.mxu0 %v1780
      %v1910 = vpop.f32.mrf.mxu0
      %v1911 = vadd.f32 %v1802, %v1910
      %v1912 = vpop.f32.mrf.mxu0
      %v1913 = vadd.f32 %v1802, %v1912
      %1914 = vmatmul.bf16.gmra.mxu0 %v1781
      %v1915 = vpop.f32.mrf.mxu0
      %v1916 = vadd.f32 %v1802, %v1915
      %v1917 = vpop.f32.mrf.mxu0
      %v1918 = vadd.f32 %v1802, %v1917
      %1919 = vmatmul.bf16.gmra.mxu0 %v1782
      %v1920 = vpop.f32.mrf.mxu0
      %v1921 = vadd.f32 %v1802, %v1920
      %v1922 = vpop.f32.mrf.mxu0
      %v1923 = vadd.f32 %v1802, %v1922
      %1924 = vmatmul.bf16.gmra.mxu0 %v1783
      %v1925 = vpop.f32.mrf.mxu0
      %v1926 = vadd.f32 %v1802, %v1925
      %v1927 = vpop.f32.mrf.mxu0
      %v1928 = vadd.f32 %v1802, %v1927
      %1929 = vmatmul.bf16.gmra.mxu0 %v1784
      %v1930 = vpop.f32.mrf.mxu0
      %v1931 = vadd.f32 %v1802, %v1930
      %v1932 = vpop.f32.mrf.mxu0
      %v1933 = vadd.f32 %v1802, %v1932
      %1934 = vmatmul.bf16.gmra.mxu0 %v1785
      %v1935 = vpop.f32.mrf.mxu0
      %v1936 = vadd.f32 %v1802, %v1935
      %v1937 = vpop.f32.mrf.mxu0
      %v1938 = vadd.f32 %v1802, %v1937
      %1939 = vmatmul.bf16.gmra.mxu0 %v1786
      %v1940 = vpop.f32.mrf.mxu0
      %v1941 = vadd.f32 %v1802, %v1940
      %v1942 = vpop.f32.mrf.mxu0
      %v1943 = vadd.f32 %v1802, %v1942
      %1944 = vmatmul.bf16.gmra.mxu0 %v1787
      %v1945 = vpop.f32.mrf.mxu0
      %v1946 = vadd.f32 %v1802, %v1945
      %v1947 = vpop.f32.mrf.mxu0
      %v1948 = vadd.f32 %v1802, %v1947
      %1949 = vmatmul.bf16.gmra.mxu0 %v1788
      %v1950 = vpop.f32.mrf.mxu0
      %v1951 = vadd.f32 %v1802, %v1950
      %v1952 = vpop.f32.mrf.mxu0
      %v1953 = vadd.f32 %v1802, %v1952
      %1954 = vmatmul.bf16.gmra.mxu0 %v1789
      %v1955 = vpop.f32.mrf.mxu0
      %v1956 = vadd.f32 %v1802, %v1955
      %v1957 = vpop.f32.mrf.mxu0
      %v1958 = vadd.f32 %v1802, %v1957
      %1959 = vmatmul.bf16.gmra.mxu0 %v1790
      %v1960 = vpop.f32.mrf.mxu0
      %v1961 = vadd.f32 %v1802, %v1960
      %v1962 = vpop.f32.mrf.mxu0
      %v1963 = vadd.f32 %v1802, %v1962
      %1964 = vmatmul.bf16.gmra.mxu0 %v1791
      %v1965 = vpop.f32.mrf.mxu0
      %v1966 = vadd.f32 %v1802, %v1965
      %v1967 = vpop.f32.mrf.mxu0
      %v1968 = vadd.f32 %v1802, %v1967
      %1969 = vmatmul.bf16.gmra.mxu0 %v1792
      %v1970 = vpop.f32.mrf.mxu0
      %v1971 = vadd.f32 %v1802, %v1970
      %v1972 = vpop.f32.mrf.mxu0
      %v1973 = vadd.f32 %v1802, %v1972
      %1974 = vmatmul.bf16.gmra.mxu0 %v1793
      %v1975 = vpop.f32.mrf.mxu0
      %v1976 = vadd.f32 %v1802, %v1975
      %v1977 = vpop.f32.mrf.mxu0
      %v1978 = vadd.f32 %v1802, %v1977
      %1979 = vmatmul.bf16.gmra.mxu0 %v1794
      %v1980 = vpop.f32.mrf.mxu0
      %v1981 = vadd.f32 %v1802, %v1980
      %v1982 = vpop.f32.mrf.mxu0
      %v1983 = vadd.f32 %v1802, %v1982
      %1984 = vmatmul.bf16.gmra.mxu0 %v1795
      %v1985 = vpop.f32.mrf.mxu0
      %v1986 = vadd.f32 %v1802, %v1985
      %v1987 = vpop.f32.mrf.mxu0
      %v1988 = vadd.f32 %v1802, %v1987
      %1989 = vmatmul.bf16.gmra.mxu0 %v1796
      %v1990 = vpop.f32.mrf.mxu0
      %v1991 = vadd.f32 %v1802, %v1990
      %v1992 = vpop.f32.mrf.mxu0
      %v1993 = vadd.f32 %v1802, %v1992
      %1994 = vmatmul.bf16.gmra.mxu0 %v1797
      %v1995 = vpop.f32.mrf.mxu0
      %v1996 = vadd.f32 %v1802, %v1995
      %v1997 = vpop.f32.mrf.mxu0
      %v1998 = vadd.f32 %v1802, %v1997
      %1999 = vmatmul.bf16.gmra.mxu0 %v1798
      %v2000 = vpop.f32.mrf.mxu0
      %v2001 = vadd.f32 %v1802, %v2000
      %v2002 = vpop.f32.mrf.mxu0
      %v2003 = vadd.f32 %v1802, %v2002
      %2004 = vmatmul.bf16.gmra.mxu0 %v1799
      %v2005 = vpop.f32.mrf.mxu0
      %v2006 = vadd.f32 %v1802, %v2005
      %v2007 = vpop.f32.mrf.mxu0
      %v2008 = vadd.f32 %v1802, %v2007
      %2009 = vmatmul.bf16.gmra.mxu0 %v1800
      %v2010 = vpop.f32.mrf.mxu0
      %v2011 = vadd.f32 %v1802, %v2010
      %v2012 = vpop.f32.mrf.mxu0
      %v2013 = vadd.f32 %v1802, %v2012
      %2014 = vmatmul.bf16.gmra.mxu0 %v1801
      %v2015 = vpop.f32.mrf.mxu0
      %v2016 = vadd.f32 %v1802, %v2015
      %v2017 = vpop.f32.mrf.mxu0
      %v2018 = vadd.f32 %v1802, %v2017
      %2019 = vdwg.mxu0
      %v2020 = vpack.c.bf16 %v1861, %v1861
      %v2021 = vpack.c.bf16 %v1863, %v1863
      %v2022 = vpack.c.bf16 %v1866, %v1866
      %v2023 = vpack.c.bf16 %v1868, %v1868
      %v2024 = vpack.c.bf16 %v1871, %v1871
      %v2025 = vpack.c.bf16 %v1873, %v1873
      %v2026 = vpack.c.bf16 %v1876, %v1876
      %v2027 = vpack.c.bf16 %v1878, %v1878
      %v2028 = vpack.c.bf16 %v1881, %v1881
      %v2029 = vpack.c.bf16 %v1883, %v1883
      %v2030 = vpack.c.bf16 %v1886, %v1886
      %v2031 = vpack.c.bf16 %v1888, %v1888
      %v2032 = vpack.c.bf16 %v1891, %v1891
      %v2033 = vpack.c.bf16 %v1893, %v1893
      %v2034 = vpack.c.bf16 %v1896, %v1896
      %v2035 = vpack.c.bf16 %v1898, %v1898
      %v2036 = vpack.c.bf16 %v1901, %v1901
      %v2037 = vpack.c.bf16 %v1903, %v1903
      %v2038 = vpack.c.bf16 %v1906, %v1906
      %v2039 = vpack.c.bf16 %v1908, %v1908
      %v2040 = vpack.c.bf16 %v1911, %v1911
      %v2041 = vpack.c.bf16 %v1913, %v1913
      %v2042 = vpack.c.bf16 %v1916, %v1916
      %v2043 = vpack.c.bf16 %v1918, %v1918
      %v2044 = vpack.c.bf16 %v1921, %v1921
      %v2045 = vpack.c.bf16 %v1923, %v1923
      %v2046 = vpack.c.bf16 %v1926, %v1926
      %v2047 = vpack.c.bf16 %v1928, %v1928
      %v2048 = vpack.c.bf16 %v1931, %v1931
      %v2049 = vpack.c.bf16 %v1933, %v1933
      %v2050 = vpack.c.bf16 %v1936, %v1936
      %v2051 = vpack.c.bf16 %v1938, %v1938
      %v2052 = vpack.c.bf16 %v1941, %v1941
      %v2053 = vpack.c.bf16 %v1943, %v1943
      %v2054 = vpack.c.bf16 %v1946, %v1946
      %v2055 = vpack.c.bf16 %v1948, %v1948
      %v2056 = vpack.c.bf16 %v1951, %v1951
      %v2057 = vpack.c.bf16 %v1953, %v1953
      %v2058 = vpack.c.bf16 %v1956, %v1956
      %v2059 = vpack.c.bf16 %v1958, %v1958
      %v2060 = vpack.c.bf16 %v1961, %v1961
      %v2061 = vpack.c.bf16 %v1963, %v1963
      %v2062 = vpack.c.bf16 %v1966, %v1966
      %v2063 = vpack.c.bf16 %v1968, %v1968
      %v2064 = vpack.c.bf16 %v1971, %v1971
      %v2065 = vpack.c.bf16 %v1973, %v1973
      %v2066 = vpack.c.bf16 %v1976, %v1976
      %v2067 = vpack.c.bf16 %v1978, %v1978
      %v2068 = vpack.c.bf16 %v1981, %v1981
      %v2069 = vpack.c.bf16 %v1983, %v1983
      %v2070 = vpack.c.bf16 %v1986, %v1986
      %v2071 = vpack.c.bf16 %v1988, %v1988
      %v2072 = vpack.c.bf16 %v1991, %v1991
      %v2073 = vpack.c.bf16 %v1993, %v1993
      %v2074 = vpack.c.bf16 %v1996, %v1996
      %v2075 = vpack.c.bf16 %v1998, %v1998
      %v2076 = vpack.c.bf16 %v2001, %v2001
      %v2077 = vpack.c.bf16 %v2003, %v2003
      %v2078 = vpack.c.bf16 %v2006, %v2006
      %v2079 = vpack.c.bf16 %v2008, %v2008
      %v2080 = vpack.c.bf16 %v2011, %v2011
      %v2081 = vpack.c.bf16 %v2013, %v2013
      %v2082 = vpack.c.bf16 %v2016, %v2016
      %v2083 = vpack.c.bf16 %v2018, %v2018
      %2084 = vst [vmem:[%s221] sm:$0xf] %v2020
      %2085 = vst [vmem:[%s221 + $0x4] sm:$0xf] %v2021
      %2086 = vst [vmem:[%s221 + $0x8] sm:$0xf] %v2022
      %2087 = vst [vmem:[%s221 + $0xc] sm:$0xf] %v2023
      %2088 = vst [vmem:[%s221 + $0x10] sm:$0xf] %v2024
      %2089 = vst [vmem:[%s221 + $0x14] sm:$0xf] %v2025
      %2090 = vst [vmem:[%s221 + $0x18] sm:$0xf] %v2026
      %2091 = vst [vmem:[%s221 + $0x1c] sm:$0xf] %v2027
      %2092 = vst [vmem:[%s221 + $0x20] sm:$0xf] %v2028
      %2093 = vst [vmem:[%s221 + $0x24] sm:$0xf] %v2029
      %2094 = vst [vmem:[%s221 + $0x28] sm:$0xf] %v2030
      %2095 = vst [vmem:[%s221 + $0x2c] sm:$0xf] %v2031
      %2096 = vst [vmem:[%s221 + $0x30] sm:$0xf] %v2032
      %2097 = vst [vmem:[%s221 + $0x34] sm:$0xf] %v2033
      %2098 = vst [vmem:[%s221 + $0x38] sm:$0xf] %v2034
      %2099 = vst [vmem:[%s221 + $0x3c] sm:$0xf] %v2035
      %2100 = vst [vmem:[%s221 + $0x40] sm:$0xf] %v2036
      %2101 = vst [vmem:[%s221 + $0x44] sm:$0xf] %v2037
      %2102 = vst [vmem:[%s221 + $0x48] sm:$0xf] %v2038
      %2103 = vst [vmem:[%s221 + $0x4c] sm:$0xf] %v2039
      %2104 = vst [vmem:[%s221 + $0x50] sm:$0xf] %v2040
      %2105 = vst [vmem:[%s221 + $0x54] sm:$0xf] %v2041
      %2106 = vst [vmem:[%s221 + $0x58] sm:$0xf] %v2042
      %2107 = vst [vmem:[%s221 + $0x5c] sm:$0xf] %v2043
      %2108 = vst [vmem:[%s221 + $0x60] sm:$0xf] %v2044
      %2109 = vst [vmem:[%s221 + $0x64] sm:$0xf] %v2045
      %2110 = vst [vmem:[%s221 + $0x68] sm:$0xf] %v2046
      %2111 = vst [vmem:[%s221 + $0x6c] sm:$0xf] %v2047
      %2112 = vst [vmem:[%s221 + $0x70] sm:$0xf] %v2048
      %2113 = vst [vmem:[%s221 + $0x74] sm:$0xf] %v2049
      %2114 = vst [vmem:[%s221 + $0x78] sm:$0xf] %v2050
      %2115 = vst [vmem:[%s221 + $0x7c] sm:$0xf] %v2051
      %2116 = vst [vmem:[%s221 + $0x80] sm:$0xf] %v2052
      %2117 = vst [vmem:[%s221 + $0x84] sm:$0xf] %v2053
      %2118 = vst [vmem:[%s221 + $0x88] sm:$0xf] %v2054
      %2119 = vst [vmem:[%s221 + $0x8c] sm:$0xf] %v2055
      %2120 = vst [vmem:[%s221 + $0x90] sm:$0xf] %v2056
      %2121 = vst [vmem:[%s221 + $0x94] sm:$0xf] %v2057
      %2122 = vst [vmem:[%s221 + $0x98] sm:$0xf] %v2058
      %2123 = vst [vmem:[%s221 + $0x9c] sm:$0xf] %v2059
      %2124 = vst [vmem:[%s221 + $0xa0] sm:$0xf] %v2060
      %2125 = vst [vmem:[%s221 + $0xa4] sm:$0xf] %v2061
      %2126 = vst [vmem:[%s221 + $0xa8] sm:$0xf] %v2062
      %2127 = vst [vmem:[%s221 + $0xac] sm:$0xf] %v2063
      %2128 = vst [vmem:[%s221 + $0xb0] sm:$0xf] %v2064
      %2129 = vst [vmem:[%s221 + $0xb4] sm:$0xf] %v2065
      %2130 = vst [vmem:[%s221 + $0xb8] sm:$0xf] %v2066
      %2131 = vst [vmem:[%s221 + $0xbc] sm:$0xf] %v2067
      %2132 = vst [vmem:[%s221 + $0xc0] sm:$0xf] %v2068
      %2133 = vst [vmem:[%s221 + $0xc4] sm:$0xf] %v2069
      %2134 = vst [vmem:[%s221 + $0xc8] sm:$0xf] %v2070
      %2135 = vst [vmem:[%s221 + $0xcc] sm:$0xf] %v2071
      %2136 = vst [vmem:[%s221 + $0xd0] sm:$0xf] %v2072
      %2137 = vst [vmem:[%s221 + $0xd4] sm:$0xf] %v2073
      %2138 = vst [vmem:[%s221 + $0xd8] sm:$0xf] %v2074
      %2139 = vst [vmem:[%s221 + $0xdc] sm:$0xf] %v2075
      %2140 = vst [vmem:[%s221 + $0xe0] sm:$0xf] %v2076
      %2141 = vst [vmem:[%s221 + $0xe4] sm:$0xf] %v2077
      %2142 = vst [vmem:[%s221 + $0xe8] sm:$0xf] %v2078
      %2143 = vst [vmem:[%s221 + $0xec] sm:$0xf] %v2079
      %2144 = vst [vmem:[%s221 + $0xf0] sm:$0xf] %v2080
      %2145 = vst [vmem:[%s221 + $0xf4] sm:$0xf] %v2081
      %2146 = vst [vmem:[%s221 + $0xf8] sm:$0xf] %v2082
      %2147 = vst [vmem:[%s221 + $0xfc] sm:$0xf] %v2083
      %s2148 = smul.u32 64, %s15
      %p2149 = scmp.lt.s32.totalorder %s2148, 127
      %s2150 = scalar_select %p2149, %s2148, 127
      %s2151 = smul.addr %s2150, 4
      %s2152 = scalar_lea.vmem %s4, %s2151
      // Predicated region
      $region37: #{forward.1} parent=35 // pred_check
        %p2153 = pneg %p127
      $region38: #{forward.1} parent=35 // pred_check_branch
        %2155 = sbr.rel (%p2153) target = $region40
      $region39: #{forward.1} parent=35 // pred_region
        %s2156 = smul.u32 64, %s15
      $region40: #{forward.1} parent=35 // pred_fallthru
        _
    $region36: #{forward.1} parent=5 // pred_fallthru
      _
    %p2157 = scmp.le.s32.totalorder 2, %s10
    // Predicated region
    $region41: #{forward.1} parent=5 // pred_check
      %p2158 = pneg %p2157
    $region42: #{forward.1} parent=5 // pred_check_branch
      %2160 = sbr.rel (%p2158) target = $region44
    $region43: #{forward.1} parent=5 // pred_region
      %s2161 = ssub.s32 %s10, 2
      // Predicated region
      $region45: #{forward.1} parent=43 // pred_check
        %p2162 = pneg %p133
      $region46: #{forward.1} parent=43 // pred_check_branch
        %2164 = sbr.rel (%p2162) target = $region48
      $region47: #{forward.1} parent=43 // pred_region
        %s2165 = smul.u32 64, %s16
        %p2166 = scmp.lt.s32.totalorder %s2165, 127
        %s2167 = scalar_select %p2166, %s2165, 127
        %s2168 = smul.addr %s2167, 4
        %s2169 = scalar_lea.vmem %s4, %s2168
      $region48: #{forward.1} parent=43 // pred_fallthru
        _
    $region44: #{forward.1} parent=5 // pred_fallthru
      _
  $region6: #{forward.1} parent=0 // loop_footer
    %s14 = sadd.s32 1, %s10
  $region7: #{forward.1} parent=0 // loop_footer_branch
    %9 = sbr.rel target = $region3
  $region8: #{forward.1} parent=0 // loop_exit
    _

</llo_original>
